<compile_context>
chip_gen: v7x
topology: tpu7x:2x2x1
jax: 0.10.0
libtpu: 0.0.40
codegen_flags: <defaults>
</compile_context>

<pallas_src>
import jax
import jax.numpy as jnp
from jax.experimental import pallas as pl
from jax.experimental.pallas import tpu as pltpu


def _cdiv(a, b):
    return (a + b - 1) // b


def _round_up(a, b):
    return _cdiv(a, b) * b


def _vmem_limit_bytes():
    """Generation-aware VMEM limit: ~75% of per-core capacity
    (~96 MiB on v5e/v6e, ~48 MiB on v7x)."""
    try:
        cap = int(pltpu.get_tpu_info().vmem_capacity_bytes)
    except Exception:
        cap = 64 * 1024 * 1024
    return int(cap * 3 // 4)


def _make_fcn_head_kernel(tile_h, w_pad, cin3, cmid_p):
    rows = tile_h * w_pad

    def kernel(x_ref, w1_ref, shift_ref, w2_ref, b2_ref, o_ref):
        # x_ref: (tile_h+2, w_pad, 3*cin) haloed row tile; kw taps were folded
        # into channels by the wrapper, so every window below is a contiguous
        # leading-axis slice (no relayout traffic, no masked sublane loads).
        acc = jnp.zeros((rows, cmid_p), jnp.float32)
        for kh in range(3):
            patch = x_ref[kh:kh + tile_h].reshape(rows, cin3)
            acc = acc + jnp.dot(patch, w1_ref[kh],
                                preferred_element_type=jnp.float32)
        # BatchNorm (eval): gamma/sqrt(var+eps) already folded into w1; apply
        # the remaining shift + ReLU in f32 (safe on v5e, which has no bf16 VALU).
        hidden = jnp.maximum(acc + shift_ref[...], 0.0)
        # Dropout2d(0.1) in eval mode is identity -> nothing to do.
        # 1x1 conv (matmul) + bias; output lanes padded to a multiple of 128
        # so the store is a full-lane vst.
        out = jnp.dot(hidden.astype(w2_ref.dtype), w2_ref[...],
                      preferred_element_type=jnp.float32) + b2_ref[...]
        o_ref[...] = out.astype(o_ref.dtype)

    return kernel


def _pick_tile_h(h, n, w_pad, cin3, cmid_p, cpad, in_bytes, vmem_budget,
                 single_buffer_weights, max_rows=4096, min_grid_steps=4):
    """Pick the row-tile height.

    Any tile_h is valid (H is zero-padded up to nhb*tile_h); choose the
    largest one whose double-buffered input/output tiles + resident weights +
    live in-kernel values fit the VMEM budget, preferring tilings that keep at
    least `min_grid_steps` grid steps so v7x's two TensorCores both get work.
    """
    weight_factor = 1 if single_buffer_weights else 2
    weight_bytes = (weight_factor * (3 * cin3 * cmid_p + cmid_p * cpad) * in_bytes
                    + 2 * (cmid_p + cpad) * 4)

    def fits(th):
        rows = th * w_pad
        if rows > max_rows:
            return False
        tile_in = 2 * (th + 2) * w_pad * cin3 * in_bytes      # double-buffered
        tile_out = 2 * rows * cpad * 4                         # double-buffered
        # Generous live-value term (acc f32, hidden bf16, out f32, one patch).
        live = rows * (cin3 * in_bytes + cmid_p * (8 + in_bytes) + cpad * 8)
        return weight_bytes + tile_in + tile_out + live <= vmem_budget

    fitting = [th for th in range(1, h + 1) if fits(th)]
    if not fitting:
        raise ValueError(
            "FCNHead Pallas kernel: even a 1-row tile does not fit the VMEM "
            "budget; reduce channel count or raise the budget.")
    balanced = [th for th in fitting if n * _cdiv(h, th) >= min_grid_steps]
    tile_h = max(balanced) if balanced else max(fitting)
    nhb = _cdiv(h, tile_h)
    tile_h = _cdiv(h, nhb)          # even out tiles / minimize bottom padding
    nhb = _cdiv(h, tile_h)
    return tile_h, nhb


def fcn_head_forward(x_nchw, params, *, compute_dtype=jnp.bfloat16):
    """FCNHead(with_global=False) forward.
    x_nchw: (N, Cin, H, W) float32 -> (N, Cout, H, W) float32."""
    w1, bn_scale, bn_shift, w2, b2 = params        # w1: (3, 3, Cin, Cmid)
    n, cin, h, w = x_nchw.shape
    cmid = w1.shape[-1]
    cout = w2.shape[-1]

    cin3 = 3 * cin                                 # kw taps folded into channels
    cmid_p = _round_up(cmid, 128)                  # lane-dense intermediate
    cpad = _round_up(cout, 128)                    # lane-dense output stores
    w_pad = _round_up(w, 8)                        # sublane-aligned width
    in_bytes = jnp.dtype(compute_dtype).itemsize

    # Fold BN scale into the 3x3 conv weights (the MXU applies it for free),
    # pack as (kh, kw*cin, cmid) to match the channel-folded input layout, and
    # pad the intermediate / output channel axes to multiples of 128.
    w1f = (w1 * bn_scale).reshape(3, cin3, cmid).astype(compute_dtype)
    w1p = jnp.zeros((3, cin3, cmid_p), compute_dtype).at[:, :, :cmid].set(w1f)
    shift = jnp.zeros((1, cmid_p), jnp.float32).at[0, :cmid].set(
        bn_shift.astype(jnp.float32))
    w2p = jnp.zeros((cmid_p, cpad), compute_dtype).at[:cmid, :cout].set(
        w2.astype(compute_dtype))
    b2p = jnp.zeros((1, cpad), jnp.float32).at[0, :cout].set(
        b2.astype(jnp.float32))

    # NCHW -> NHWC in the compute dtype, zero-pad spatially, and fold the 3 kw
    # shifts of the 3x3 conv into the channel axis (3x channels instead of a
    # 9x im2col): the kernel then only slices along the leading row axis.
    x_nhwc = jnp.transpose(x_nchw, (0, 2, 3, 1)).astype(compute_dtype)
    xp = jnp.pad(x_nhwc, ((0, 0), (1, 1), (1, 1), (0, 0)))
    x_cat = jnp.concatenate([xp[:, :, kw:kw + w, :] for kw in range(3)], axis=-1)

    vmem_limit = _vmem_limit_bytes()

    def attempt(single_buffer_weights):
        tile_h, nhb = _pick_tile_h(
            h, n, w_pad, cin3, cmid_p, cpad, in_bytes,
            vmem_budget=vmem_limit - (2 << 20),
            single_buffer_weights=single_buffer_weights)
        h_pad = nhb * tile_h
        rows = tile_h * w_pad

        # Haloed row tiles: only 2 duplicated rows per tile.
        # TODO(synk): on v5e this staging copy could be avoided entirely by
        # passing the padded activation with memory_space=pl.ANY and manually
        # DMAing the overlapping (tile_h+2)-row windows (P4 double-buffering).
        xc = jnp.pad(x_cat, ((0, 0), (0, h_pad - h), (0, w_pad - w), (0, 0)))
        x_blocks = jnp.stack(
            [xc[:, i * tile_h:i * tile_h + tile_h + 2] for i in range(nhb)],
            axis=1).reshape(n * nhb, tile_h + 2, w_pad, cin3)

        # Resident operands have a constant block index; single-buffer them so
        # large real-model weights (Cin=2048) fit v7x's 64 MiB VMEM.
        res_kw = ({"pipeline_mode": pl.Buffered(1)}
                  if single_buffer_weights else {})

        kernel = _make_fcn_head_kernel(tile_h, w_pad, cin3, cmid_p)
        out_flat = pl.pallas_call(
            kernel,
            out_shape=jax.ShapeDtypeStruct((n * nhb * rows, cpad), jnp.float32),
            grid_spec=pltpu.PrefetchScalarGridSpec(
                num_scalar_prefetch=0,
                grid=(n * nhb,),
                in_specs=[
                    # haloed input row tile (pipelined / double-buffered)
                    pl.BlockSpec((None, tile_h + 2, w_pad, cin3),
                                 lambda b: (b, 0, 0, 0)),
                    # resident weights / BN shift / bias
                    pl.BlockSpec((3, cin3, cmid_p), lambda b: (0, 0, 0), **res_kw),
                    pl.BlockSpec((1, cmid_p), lambda b: (0, 0), **res_kw),
                    pl.BlockSpec((cmid_p, cpad), lambda b: (0, 0), **res_kw),
                    pl.BlockSpec((1, cpad), lambda b: (0, 0), **res_kw),
                ],
                out_specs=pl.BlockSpec((rows, cpad), lambda b: (b, 0)),
            ),
            compiler_params=pltpu.CompilerParams(
                dimension_semantics=("parallel",),   # megacore-splittable map
                vmem_limit_bytes=vmem_limit),        # generation-aware
        )(x_blocks, w1p, shift, w2p, b2p)

        out = out_flat.reshape(n, h_pad, w_pad, cpad)[:, :h, :w, :cout]
        # TODO(synk): if the consumer accepts NHWC / bf16, this slice+transpose
        # (and the cpad write amplification) can be skipped.
        return jnp.transpose(out, (0, 3, 1, 2))

    try:
        return jax.block_until_ready(attempt(True))
    except Exception:
        # This JAX version rejected single-buffered resident operands
        # (pl.Buffered(1)); fall back to default double-buffering.
        return attempt(False)


def make_params(in_channels, out_channels, key):
    """Deterministic synthetic parameters matching FCNHead(with_global=False)."""
    inter = in_channels // 4
    k1, k2, k3 = jax.random.split(key, 3)
    # 3x3 conv weight in (kh, kw, Cin, Cmid) layout.
    # NOTE: a real PyTorch Conv2d weight is (Cmid, Cin, kh, kw); permute with
    # weight.transpose(2, 3, 1, 0) before passing it here.
    w1 = jax.random.normal(k1, (3, 3, in_channels, inter), jnp.float32) * 0.05
    # BatchNorm (eval): fold gamma/beta/mean/var into scale & shift.
    eps = 1e-5
    gamma = 1.0 + 0.1 * jnp.arange(inter, dtype=jnp.float32)
    beta = 0.01 * jnp.arange(inter, dtype=jnp.float32)
    running_mean = 0.02 * jnp.arange(inter, dtype=jnp.float32)
    running_var = 1.0 + 0.05 * jnp.arange(inter, dtype=jnp.float32)
    bn_scale = gamma / jnp.sqrt(running_var + eps)
    bn_shift = beta - running_mean * bn_scale
    # 1x1 conv: PyTorch weight (Cout, Cmid, 1, 1) -> (Cmid, Cout); bias (Cout,).
    w2 = jax.random.normal(k2, (inter, out_channels), jnp.float32) * 0.1
    b2 = 0.01 * jax.random.normal(k3, (out_channels,), jnp.float32)
    return (w1, bn_scale, bn_shift, w2, b2)


def _reference(x_nchw, params, compute_dtype=jnp.bfloat16):
    """Pure-JAX reference with the same operand quantization as the kernel."""
    w1, bn_scale, bn_shift, w2, b2 = params
    q = lambda a: a.astype(compute_dtype).astype(jnp.float32)
    x = q(jnp.transpose(x_nchw, (0, 2, 3, 1)))
    n, h, w, _ = x.shape
    cmid = w1.shape[-1]
    w1f = q(w1 * bn_scale)
    xp = jnp.pad(x, ((0, 0), (1, 1), (1, 1), (0, 0)))
    acc = jnp.zeros((n, h, w, cmid), jnp.float32)
    for kh in range(3):
        for kw in range(3):
            acc = acc + jnp.einsum('nhwc,cm->nhwm',
                                   xp[:, kh:kh + h, kw:kw + w, :], w1f[kh, kw])
    hid = q(jnp.maximum(acc + bn_shift, 0.0))
    out = jnp.einsum('nhwm,mo->nhwo', hid, q(w2)) + b2
    return jnp.transpose(out, (0, 3, 1, 2))


if __name__ == "__main__":
    key = jax.random.PRNGKey(0)
    kx, kp = jax.random.split(key)

    N, Cin, H, W = 2, 32, 16, 16       # inter_channels = Cin // 4 = 8
    Cout = 8
    x = jax.random.normal(kx, (N, Cin, H, W), jnp.float32)
    params = make_params(Cin, Cout, kp)

    out = jax.block_until_ready(fcn_head_forward(x, params))
    ref = _reference(x, params, jnp.bfloat16)

    assert out.shape == (N, Cout, H, W)
    max_err = float(jnp.max(jnp.abs(out - ref)))
    assert jnp.allclose(out, ref, atol=3e-3, rtol=3e-3), max_err

    # TODO(synk): with_global=True branch (GlobalPooling + ConcurrentModule) is
    # not exercised by the default constructor args; only the default path is
    # implemented here.
    print("KERNEL_OK")
</pallas_src>

<mosaic_0001>
module attributes {stable_mosaic.version = 11 : i64} {
  func.func @kernel(%arg0: i32, %arg1: memref<1x10x16x96xbf16, #tpu.memory_space<vmem>>, %arg2: memref<3x96x128xbf16, #tpu.memory_space<vmem>>, %arg3: memref<1x128xf32, #tpu.memory_space<vmem>>, %arg4: memref<128x128xbf16, #tpu.memory_space<vmem>>, %arg5: memref<1x128xf32, #tpu.memory_space<vmem>>, %arg6: memref<128x128xf32, #tpu.memory_space<vmem>>) attributes {dimension_semantics = [#tpu.dimension_semantics<parallel>], iteration_bounds = array<i64: 4>, scalar_prefetch = 0 : i64, scratch_operands = 0 : i64, tpu.core_type = #tpu.core_type<tc>, window_params = [{transform_indices = @transform_0, window_bounds = array<i64: 1, 10, 16, 96>}, {pipeline_mode = #tpu.pipeline_mode<synchronous>, transform_indices = @transform_1, window_bounds = array<i64: 3, 96, 128>}, {pipeline_mode = #tpu.pipeline_mode<synchronous>, transform_indices = @transform_2, window_bounds = array<i64: 1, 128>}, {pipeline_mode = #tpu.pipeline_mode<synchronous>, transform_indices = @transform_3, window_bounds = array<i64: 128, 128>}, {pipeline_mode = #tpu.pipeline_mode<synchronous>, transform_indices = @transform_4, window_bounds = array<i64: 1, 128>}, {transform_indices = @transform_5, window_bounds = array<i64: 128, 128>}]} {
    %cst = arith.constant 0.000000e+00 : f32
    %0 = vector.broadcast %cst : f32 to vector<128x128xf32>
    %c0 = arith.constant 0 : index
    %c0_0 = arith.constant 0 : index
    %c0_1 = arith.constant 0 : index
    %c0_2 = arith.constant 0 : index
    %1 = vector.load %arg1[%c0, %c0_0, %c0_1, %c0_2] : memref<1x10x16x96xbf16, #tpu.memory_space<vmem>>, vector<1x8x16x96xbf16>
    %2 = vector.shape_cast %1 : vector<1x8x16x96xbf16> to vector<8x16x96xbf16>
    %3 = vector.shape_cast %2 : vector<8x16x96xbf16> to vector<128x96xbf16>
    %c0_3 = arith.constant 0 : index
    %c0_4 = arith.constant 0 : index
    %c0_5 = arith.constant 0 : index
    %4 = vector.load %arg2[%c0_3, %c0_4, %c0_5] : memref<3x96x128xbf16, #tpu.memory_space<vmem>>, vector<1x96x128xbf16>
    %5 = vector.shape_cast %4 : vector<1x96x128xbf16> to vector<96x128xbf16>
    %cst_6 = arith.constant dense<0.000000e+00> : vector<128x128xf32>
    %6 = tpu.matmul %3, %5, %cst_6 {dimension_numbers = #tpu.dot_dimension_numbers<[1], [0], [0], [1], [0, 0, 1, 1], [], []>} : vector<128x96xbf16>, vector<96x128xbf16>, vector<128x128xf32> -> vector<128x128xf32>
    %7 = arith.addf %0, %6 : vector<128x128xf32>
    %c0_7 = arith.constant 0 : index
    %c1 = arith.constant 1 : index
    %c0_8 = arith.constant 0 : index
    %c0_9 = arith.constant 0 : index
    %8 = vector.load %arg1[%c0_7, %c1, %c0_8, %c0_9] : memref<1x10x16x96xbf16, #tpu.memory_space<vmem>>, vector<1x8x16x96xbf16>
    %9 = vector.shape_cast %8 : vector<1x8x16x96xbf16> to vector<8x16x96xbf16>
    %10 = vector.shape_cast %9 : vector<8x16x96xbf16> to vector<128x96xbf16>
    %c1_10 = arith.constant 1 : index
    %c0_11 = arith.constant 0 : index
    %c0_12 = arith.constant 0 : index
    %11 = vector.load %arg2[%c1_10, %c0_11, %c0_12] : memref<3x96x128xbf16, #tpu.memory_space<vmem>>, vector<1x96x128xbf16>
    %12 = vector.shape_cast %11 : vector<1x96x128xbf16> to vector<96x128xbf16>
    %cst_13 = arith.constant dense<0.000000e+00> : vector<128x128xf32>
    %13 = tpu.matmul %10, %12, %cst_13 {dimension_numbers = #tpu.dot_dimension_numbers<[1], [0], [0], [1], [0, 0, 1, 1], [], []>} : vector<128x96xbf16>, vector<96x128xbf16>, vector<128x128xf32> -> vector<128x128xf32>
    %14 = arith.addf %7, %13 : vector<128x128xf32>
    %c0_14 = arith.constant 0 : index
    %c2 = arith.constant 2 : index
    %c0_15 = arith.constant 0 : index
    %c0_16 = arith.constant 0 : index
    %15 = vector.load %arg1[%c0_14, %c2, %c0_15, %c0_16] : memref<1x10x16x96xbf16, #tpu.memory_space<vmem>>, vector<1x8x16x96xbf16>
    %16 = vector.shape_cast %15 : vector<1x8x16x96xbf16> to vector<8x16x96xbf16>
    %17 = vector.shape_cast %16 : vector<8x16x96xbf16> to vector<128x96xbf16>
    %c2_17 = arith.constant 2 : index
    %c0_18 = arith.constant 0 : index
    %c0_19 = arith.constant 0 : index
    %18 = vector.load %arg2[%c2_17, %c0_18, %c0_19] : memref<3x96x128xbf16, #tpu.memory_space<vmem>>, vector<1x96x128xbf16>
    %19 = vector.shape_cast %18 : vector<1x96x128xbf16> to vector<96x128xbf16>
    %cst_20 = arith.constant dense<0.000000e+00> : vector<128x128xf32>
    %20 = tpu.matmul %17, %19, %cst_20 {dimension_numbers = #tpu.dot_dimension_numbers<[1], [0], [0], [1], [0, 0, 1, 1], [], []>} : vector<128x96xbf16>, vector<96x128xbf16>, vector<128x128xf32> -> vector<128x128xf32>
    %21 = arith.addf %14, %20 : vector<128x128xf32>
    %c0_21 = arith.constant 0 : index
    %c0_22 = arith.constant 0 : index
    %22 = vector.load %arg3[%c0_21, %c0_22] : memref<1x128xf32, #tpu.memory_space<vmem>>, vector<1x128xf32>
    %23 = vector.broadcast %22 : vector<1x128xf32> to vector<128x128xf32>
    %24 = arith.addf %21, %23 : vector<128x128xf32>
    %cst_23 = arith.constant 0.000000e+00 : f32
    %25 = vector.broadcast %cst_23 : f32 to vector<128x128xf32>
    %26 = arith.maximumf %24, %25 : vector<128x128xf32>
    %27 = arith.truncf %26 : vector<128x128xf32> to vector<128x128xbf16>
    %c0_24 = arith.constant 0 : index
    %c0_25 = arith.constant 0 : index
    %28 = vector.load %arg4[%c0_24, %c0_25] : memref<128x128xbf16, #tpu.memory_space<vmem>>, vector<128x128xbf16>
    %cst_26 = arith.constant dense<0.000000e+00> : vector<128x128xf32>
    %29 = tpu.matmul %27, %28, %cst_26 {dimension_numbers = #tpu.dot_dimension_numbers<[1], [0], [0], [1], [0, 0, 1, 1], [], []>} : vector<128x128xbf16>, vector<128x128xbf16>, vector<128x128xf32> -> vector<128x128xf32>
    %c0_27 = arith.constant 0 : index
    %c0_28 = arith.constant 0 : index
    %30 = vector.load %arg5[%c0_27, %c0_28] : memref<1x128xf32, #tpu.memory_space<vmem>>, vector<1x128xf32>
    %31 = vector.broadcast %30 : vector<1x128xf32> to vector<128x128xf32>
    %32 = arith.addf %29, %31 : vector<128x128xf32>
    %c0_29 = arith.constant 0 : index
    %c0_30 = arith.constant 0 : index
    %33 = vector.load %arg6[%c0_29, %c0_30] : memref<128x128xf32, #tpu.memory_space<vmem>>, vector<128x128xf32>
    tpu.vector_store %arg6[%c0_29, %c0_30], %32 {strides = array<i32>} : memref<128x128xf32, #tpu.memory_space<vmem>>, vector<128x128xf32>,
    return
  }
  func.func @transform_0(%arg0: i32) -> (i32, i32, i32, i32) {
    %c0_i32 = arith.constant 0 : i32
    %c0_i32_0 = arith.constant 0 : i32
    %c0_i32_1 = arith.constant 0 : i32
    %c0_i32_2 = arith.constant 0 : i32
    return %arg0, %c0_i32, %c0_i32_0, %c0_i32_1 : i32, i32, i32, i32
  }
  func.func @transform_1(%arg0: i32) -> (i32, i32, i32) {
    %c0_i32 = arith.constant 0 : i32
    %c0_i32_0 = arith.constant 0 : i32
    %c0_i32_1 = arith.constant 0 : i32
    %c0_i32_2 = arith.constant 0 : i32
    return %c0_i32, %c0_i32_0, %c0_i32_1 : i32, i32, i32
  }
  func.func @transform_2(%arg0: i32) -> (i32, i32) {
    %c0_i32 = arith.constant 0 : i32
    %c0_i32_0 = arith.constant 0 : i32
    %c0_i32_1 = arith.constant 0 : i32
    return %c0_i32, %c0_i32_0 : i32, i32
  }
  func.func @transform_3(%arg0: i32) -> (i32, i32) {
    %c0_i32 = arith.constant 0 : i32
    %c0_i32_0 = arith.constant 0 : i32
    %c0_i32_1 = arith.constant 0 : i32
    return %c0_i32, %c0_i32_0 : i32, i32
  }
  func.func @transform_4(%arg0: i32) -> (i32, i32) {
    %c0_i32 = arith.constant 0 : i32
    %c0_i32_0 = arith.constant 0 : i32
    %c0_i32_1 = arith.constant 0 : i32
    return %c0_i32, %c0_i32_0 : i32, i32
  }
  func.func @transform_5(%arg0: i32) -> (i32, i32) {
    %c0_i32 = arith.constant 0 : i32
    %c0_i32_0 = arith.constant 0 : i32
    return %arg0, %c0_i32 : i32, i32
  }
}

module attributes {stable_mosaic.version = 11 : i64} {
  func.func @kernel(%arg0: i32, %arg1: memref<1x10x16x96xbf16, #tpu.memory_space<vmem>>, %arg2: memref<3x96x128xbf16, #tpu.memory_space<vmem>>, %arg3: memref<1x128xf32, #tpu.memory_space<vmem>>, %arg4: memref<128x128xbf16, #tpu.memory_space<vmem>>, %arg5: memref<1x128xf32, #tpu.memory_space<vmem>>, %arg6: memref<128x128xf32, #tpu.memory_space<vmem>>) attributes {dimension_semantics = [#tpu.dimension_semantics<parallel>], iteration_bounds = array<i64: 4>, scalar_prefetch = 0 : i64, scratch_operands = 0 : i64, tpu.core_type = #tpu.core_type<tc>, window_params = [{transform_indices = @transform_0, window_bounds = array<i64: 1, 10, 16, 96>}, {pipeline_mode = #tpu.pipeline_mode<synchronous>, transform_indices = @transform_1, window_bounds = array<i64: 3, 96, 128>}, {pipeline_mode = #tpu.pipeline_mode<synchronous>, transform_indices = @transform_2, window_bounds = array<i64: 1, 128>}, {pipeline_mode = #tpu.pipeline_mode<synchronous>, transform_indices = @transform_3, window_bounds = array<i64: 128, 128>}, {pipeline_mode = #tpu.pipeline_mode<synchronous>, transform_indices = @transform_4, window_bounds = array<i64: 1, 128>}, {transform_indices = @transform_5, window_bounds = array<i64: 128, 128>}]} {
    %cst = arith.constant 0.000000e+00 : f32
    %0 = vector.broadcast %cst : f32 to vector<128x128xf32>
    %c0 = arith.constant 0 : index
    %c0_0 = arith.constant 0 : index
    %c0_1 = arith.constant 0 : index
    %c0_2 = arith.constant 0 : index
    %1 = vector.load %arg1[%c0, %c0_0, %c0_1, %c0_2] : memref<1x10x16x96xbf16, #tpu.memory_space<vmem>>, vector<1x8x16x96xbf16>
    %2 = vector.shape_cast %1 : vector<1x8x16x96xbf16> to vector<8x16x96xbf16>
    %3 = vector.shape_cast %2 : vector<8x16x96xbf16> to vector<128x96xbf16>
    %c0_3 = arith.constant 0 : index
    %c0_4 = arith.constant 0 : index
    %c0_5 = arith.constant 0 : index
    %4 = vector.load %arg2[%c0_3, %c0_4, %c0_5] : memref<3x96x128xbf16, #tpu.memory_space<vmem>>, vector<1x96x128xbf16>
    %5 = vector.shape_cast %4 : vector<1x96x128xbf16> to vector<96x128xbf16>
    %cst_6 = arith.constant dense<0.000000e+00> : vector<128x128xf32>
    %6 = tpu.matmul %3, %5, %cst_6 {dimension_numbers = #tpu.dot_dimension_numbers<[1], [0], [0], [1], [0, 0, 1, 1], [], []>} : vector<128x96xbf16>, vector<96x128xbf16>, vector<128x128xf32> -> vector<128x128xf32>
    %7 = arith.addf %0, %6 : vector<128x128xf32>
    %c0_7 = arith.constant 0 : index
    %c1 = arith.constant 1 : index
    %c0_8 = arith.constant 0 : index
    %c0_9 = arith.constant 0 : index
    %8 = vector.load %arg1[%c0_7, %c1, %c0_8, %c0_9] : memref<1x10x16x96xbf16, #tpu.memory_space<vmem>>, vector<1x8x16x96xbf16>
    %9 = vector.shape_cast %8 : vector<1x8x16x96xbf16> to vector<8x16x96xbf16>
    %10 = vector.shape_cast %9 : vector<8x16x96xbf16> to vector<128x96xbf16>
    %c1_10 = arith.constant 1 : index
    %c0_11 = arith.constant 0 : index
    %c0_12 = arith.constant 0 : index
    %11 = vector.load %arg2[%c1_10, %c0_11, %c0_12] : memref<3x96x128xbf16, #tpu.memory_space<vmem>>, vector<1x96x128xbf16>
    %12 = vector.shape_cast %11 : vector<1x96x128xbf16> to vector<96x128xbf16>
    %cst_13 = arith.constant dense<0.000000e+00> : vector<128x128xf32>
    %13 = tpu.matmul %10, %12, %cst_13 {dimension_numbers = #tpu.dot_dimension_numbers<[1], [0], [0], [1], [0, 0, 1, 1], [], []>} : vector<128x96xbf16>, vector<96x128xbf16>, vector<128x128xf32> -> vector<128x128xf32>
    %14 = arith.addf %7, %13 : vector<128x128xf32>
    %c0_14 = arith.constant 0 : index
    %c2 = arith.constant 2 : index
    %c0_15 = arith.constant 0 : index
    %c0_16 = arith.constant 0 : index
    %15 = vector.load %arg1[%c0_14, %c2, %c0_15, %c0_16] : memref<1x10x16x96xbf16, #tpu.memory_space<vmem>>, vector<1x8x16x96xbf16>
    %16 = vector.shape_cast %15 : vector<1x8x16x96xbf16> to vector<8x16x96xbf16>
    %17 = vector.shape_cast %16 : vector<8x16x96xbf16> to vector<128x96xbf16>
    %c2_17 = arith.constant 2 : index
    %c0_18 = arith.constant 0 : index
    %c0_19 = arith.constant 0 : index
    %18 = vector.load %arg2[%c2_17, %c0_18, %c0_19] : memref<3x96x128xbf16, #tpu.memory_space<vmem>>, vector<1x96x128xbf16>
    %19 = vector.shape_cast %18 : vector<1x96x128xbf16> to vector<96x128xbf16>
    %cst_20 = arith.constant dense<0.000000e+00> : vector<128x128xf32>
    %20 = tpu.matmul %17, %19, %cst_20 {dimension_numbers = #tpu.dot_dimension_numbers<[1], [0], [0], [1], [0, 0, 1, 1], [], []>} : vector<128x96xbf16>, vector<96x128xbf16>, vector<128x128xf32> -> vector<128x128xf32>
    %21 = arith.addf %14, %20 : vector<128x128xf32>
    %c0_21 = arith.constant 0 : index
    %c0_22 = arith.constant 0 : index
    %22 = vector.load %arg3[%c0_21, %c0_22] : memref<1x128xf32, #tpu.memory_space<vmem>>, vector<1x128xf32>
    %23 = vector.broadcast %22 : vector<1x128xf32> to vector<128x128xf32>
    %24 = arith.addf %21, %23 : vector<128x128xf32>
    %cst_23 = arith.constant 0.000000e+00 : f32
    %25 = vector.broadcast %cst_23 : f32 to vector<128x128xf32>
    %26 = arith.maximumf %24, %25 : vector<128x128xf32>
    %27 = arith.truncf %26 : vector<128x128xf32> to vector<128x128xbf16>
    %c0_24 = arith.constant 0 : index
    %c0_25 = arith.constant 0 : index
    %28 = vector.load %arg4[%c0_24, %c0_25] : memref<128x128xbf16, #tpu.memory_space<vmem>>, vector<128x128xbf16>
    %cst_26 = arith.constant dense<0.000000e+00> : vector<128x128xf32>
    %29 = tpu.matmul %27, %28, %cst_26 {dimension_numbers = #tpu.dot_dimension_numbers<[1], [0], [0], [1], [0, 0, 1, 1], [], []>} : vector<128x128xbf16>, vector<128x128xbf16>, vector<128x128xf32> -> vector<128x128xf32>
    %c0_27 = arith.constant 0 : index
    %c0_28 = arith.constant 0 : index
    %30 = vector.load %arg5[%c0_27, %c0_28] : memref<1x128xf32, #tpu.memory_space<vmem>>, vector<1x128xf32>
    %31 = vector.broadcast %30 : vector<1x128xf32> to vector<128x128xf32>
    %32 = arith.addf %29, %31 : vector<128x128xf32>
    %c0_29 = arith.constant 0 : index
    %c0_30 = arith.constant 0 : index
    %33 = vector.load %arg6[%c0_29, %c0_30] : memref<128x128xf32, #tpu.memory_space<vmem>>, vector<128x128xf32>
    tpu.vector_store %arg6[%c0_29, %c0_30], %32 {strides = array<i32>} : memref<128x128xf32, #tpu.memory_space<vmem>>, vector<128x128xf32>,
    return
  }
  func.func @transform_0(%arg0: i32) -> (i32, i32, i32, i32) {
    %c0_i32 = arith.constant 0 : i32
    %c0_i32_0 = arith.constant 0 : i32
    %c0_i32_1 = arith.constant 0 : i32
    %c0_i32_2 = arith.constant 0 : i32
    return %arg0, %c0_i32, %c0_i32_0, %c0_i32_1 : i32, i32, i32, i32
  }
  func.func @transform_1(%arg0: i32) -> (i32, i32, i32) {
    %c0_i32 = arith.constant 0 : i32
    %c0_i32_0 = arith.constant 0 : i32
    %c0_i32_1 = arith.constant 0 : i32
    %c0_i32_2 = arith.constant 0 : i32
    return %c0_i32, %c0_i32_0, %c0_i32_1 : i32, i32, i32
  }
  func.func @transform_2(%arg0: i32) -> (i32, i32) {
    %c0_i32 = arith.constant 0 : i32
    %c0_i32_0 = arith.constant 0 : i32
    %c0_i32_1 = arith.constant 0 : i32
    return %c0_i32, %c0_i32_0 : i32, i32
  }
  func.func @transform_3(%arg0: i32) -> (i32, i32) {
    %c0_i32 = arith.constant 0 : i32
    %c0_i32_0 = arith.constant 0 : i32
    %c0_i32_1 = arith.constant 0 : i32
    return %c0_i32, %c0_i32_0 : i32, i32
  }
  func.func @transform_4(%arg0: i32) -> (i32, i32) {
    %c0_i32 = arith.constant 0 : i32
    %c0_i32_0 = arith.constant 0 : i32
    %c0_i32_1 = arith.constant 0 : i32
    return %c0_i32, %c0_i32_0 : i32, i32
  }
  func.func @transform_5(%arg0: i32) -> (i32, i32) {
    %c0_i32 = arith.constant 0 : i32
    %c0_i32_0 = arith.constant 0 : i32
    return %arg0, %c0_i32 : i32, i32
  }
}

</mosaic_0001>

<llo_original>
// kernel: tpu_custom_call.1
$region0: #{tpu_custom_call.1}
  #allocation0 [shape = 'u32[]', space=smem, size = 0x4, offset = 0x4, fixed_abs, tag = 'smem constant byte address 0x4 - core index']
  #allocation1 [shape = 'u32[144,128]{1,0:T(1,128)}', space=vmem, size = 0x12000, scoped, tag = 'internal scratch']
  %s0 = inlined_call_operand.hbm [shape: bf16[4,10,16,96], index: 0, kind: input, shape index: {}]
  %s1 = inlined_call_operand.hbm [shape: bf16[3,96,128], index: 1, kind: input, shape index: {}]
  %s2 = inlined_call_operand.vmem [shape: f32[1,128], index: 2, kind: input, shape index: {}]
  %s3 = inlined_call_operand.hbm [shape: bf16[128,128], index: 3, kind: input, shape index: {}]
  %s4 = inlined_call_operand.vmem [shape: f32[1,128], index: 4, kind: input, shape index: {}]
  %s5 = inlined_call_operand.hbm [shape: f32[512,128], index: 5, kind: output, shape index: {}]
  %s6 = sld [smem:[#allocation0]]
  $region65: #{tpu_custom_call.1} parent=0
    _
  %s8 = ssub.s32 1, %s6
  %s9 = scalar_select 0, %s8, %s6
  $region1: #{tpu_custom_call.1} parent=0
    #allocation2 [shape = 'u8[81920]{0}', space=vmem, size = 0x14000, scoped, tag = 'input window, operand 0']
    #allocation3 [shape = 's32[2]{0}', space=sflag, size = 0x8, scoped, tag = 'scoped memory for tpu_custom_call.1']
    #allocation4 [shape = 's32[2]{0}', space=sflag, size = 0x8, scoped, tag = 'scoped memory for tpu_custom_call.1']
    #allocation5 [shape = 'u8[73728]{0}', space=vmem, size = 0x12000, scoped, tag = 'input window, operand 1, single buffered']
    #allocation6 [shape = 's32[1]{0}', space=sflag, size = 0x4, scoped, tag = 'scoped memory for tpu_custom_call.1']
    #allocation7 [shape = 'u8[32768]{0}', space=vmem, size = 0x8000, scoped, tag = 'input window, operand 3, single buffered']
    #allocation8 [shape = 'u8[131072]{0}', space=vmem, size = 0x20000, scoped, tag = 'output window, operand 0']
    %10 = vsyncpa [#allocation3], 0
    %s11 = scalar_lea.sflag [#allocation3], 1
    %12 = vsyncpa %s11, 0
    %13 = vsyncpa [#allocation6], 0
    %14 = vsyncpa [#allocation4], 0
    %s15 = scalar_lea.sflag [#allocation4], 1
    %16 = vsyncpa %s15, 0
    loop: start=0, step=1, limit=6
    $region2: #{tpu_custom_call.1} parent=1 // loop_pre_header
      _
    $region3: #{tpu_custom_call.1} parent=1 // loop_header
      %s18 = sphi 0, %s22
      %p19 = scmp.ge.s32.totalorder %s18, 6
      %s28 = sphi 0, %s30
      %s31 = sphi 0, %s28
      %s32 = sphi 0, %s31
      %s48 = sphi 0, %s32
      %s52 = sphi 0, %s52
      %s54 = sphi 0, %s52
      %s55 = sphi 0, %s54
      %s69 = sphi 0, %s55
      %s73 = sphi 0, %s73
      %s75 = sphi 0, %s73
      %s76 = sphi 0, %s75
      %s90 = sphi 0, %s76
      %s94 = sphi 0, %s94
      %s96 = sphi 0, %s94
      %s97 = sphi 0, %s96
      %s111 = sphi 0, %s97
      %s115 = sphi 0, %s115
      %s117 = sphi 0, %s115
      %s118 = sphi 0, %s117
      %s132 = sphi 0, %s118
      %s138 = sphi 0, %s140
      %s141 = sphi 0, %s138
      %s142 = sphi 0, %s141
      %s158 = sphi 0, %s142
    $region4: #{tpu_custom_call.1} parent=1 // loop_header_branch
      %21 = sbr.rel (%p19) target = $region8
    $region5: #{tpu_custom_call.1} parent=1 // loop_body
      %s23 = ssub.s32 %s18, 1
      %s24 = ssub.s32 %s18, 2
      %s25 = sadd.s32 %s18, 1
      %s26 = ssub.s32 %s18, %s25
      %p27 = scmp.eq.s32.totalorder %s26, 0
      %s29 = sadd.s32 %s28, 1
      %s30 = scalar_select %p27, %s28, %s29
      %p33 = pneg %p27
      %p34 = scmp.eq.s32.totalorder %s18, 3
      %p35 = por %p33, %p34
      %p36 = scmp.ne.s32.totalorder %s28, %s31
      %p37 = scmp.eq.s32.totalorder %s18, 0
      %p38 = por %p36, %p37
      %p39 = scmp.ne.s32.totalorder %s28, %s31
      %p40 = scmp.eq.s32.totalorder %s23, 3
      %p41 = por %p39, %p40
      %p42 = scmp.ne.s32.totalorder %s31, %s32
      %p43 = scmp.eq.s32.totalorder %s23, 0
      %p44 = por %p42, %p43
      %p45 = scmp.ne.s32.totalorder %s31, %s32
      %p46 = scmp.eq.s32.totalorder %s24, 3
      %p47 = por %p45, %p46
      %p49 = scmp.ne.s32.totalorder %s32, %s48
      %p50 = scmp.eq.s32.totalorder %s24, 0
      %p51 = por %p49, %p50
      %s53 = sadd.s32 %s52, 1
      %p56 = scmp.eq.s32.totalorder %s18, 3
      %p57 = scmp.ne.s32.totalorder %s52, %s54
      %p58 = scmp.eq.s32.totalorder %s18, 0
      %p59 = por %p57, %p58
      %p60 = scmp.ne.s32.totalorder %s52, %s54
      %p61 = scmp.eq.s32.totalorder %s23, 3
      %p62 = por %p60, %p61
      %p63 = scmp.ne.s32.totalorder %s54, %s55
      %p64 = scmp.eq.s32.totalorder %s23, 0
      %p65 = por %p63, %p64
      %p66 = scmp.ne.s32.totalorder %s54, %s55
      %p67 = scmp.eq.s32.totalorder %s24, 3
      %p68 = por %p66, %p67
      %p70 = scmp.ne.s32.totalorder %s55, %s69
      %p71 = scmp.eq.s32.totalorder %s24, 0
      %p72 = por %p70, %p71
      %s74 = sadd.s32 %s73, 1
      %p77 = scmp.eq.s32.totalorder %s18, 3
      %p78 = scmp.ne.s32.totalorder %s73, %s75
      %p79 = scmp.eq.s32.totalorder %s18, 0
      %p80 = por %p78, %p79
      %p81 = scmp.ne.s32.totalorder %s73, %s75
      %p82 = scmp.eq.s32.totalorder %s23, 3
      %p83 = por %p81, %p82
      %p84 = scmp.ne.s32.totalorder %s75, %s76
      %p85 = scmp.eq.s32.totalorder %s23, 0
      %p86 = por %p84, %p85
      %p87 = scmp.ne.s32.totalorder %s75, %s76
      %p88 = scmp.eq.s32.totalorder %s24, 3
      %p89 = por %p87, %p88
      %p91 = scmp.ne.s32.totalorder %s76, %s90
      %p92 = scmp.eq.s32.totalorder %s24, 0
      %p93 = por %p91, %p92
      %s95 = sadd.s32 %s94, 1
      %p98 = scmp.eq.s32.totalorder %s18, 3
      %p99 = scmp.ne.s32.totalorder %s94, %s96
      %p100 = scmp.eq.s32.totalorder %s18, 0
      %p101 = por %p99, %p100
      %p102 = scmp.ne.s32.totalorder %s94, %s96
      %p103 = scmp.eq.s32.totalorder %s23, 3
      %p104 = por %p102, %p103
      %p105 = scmp.ne.s32.totalorder %s96, %s97
      %p106 = scmp.eq.s32.totalorder %s23, 0
      %p107 = por %p105, %p106
      %p108 = scmp.ne.s32.totalorder %s96, %s97
      %p109 = scmp.eq.s32.totalorder %s24, 3
      %p110 = por %p108, %p109
      %p112 = scmp.ne.s32.totalorder %s97, %s111
      %p113 = scmp.eq.s32.totalorder %s24, 0
      %p114 = por %p112, %p113
      %s116 = sadd.s32 %s115, 1
      %p119 = scmp.eq.s32.totalorder %s18, 3
      %p120 = scmp.ne.s32.totalorder %s115, %s117
      %p121 = scmp.eq.s32.totalorder %s18, 0
      %p122 = por %p120, %p121
      %p123 = scmp.ne.s32.totalorder %s115, %s117
      %p124 = scmp.eq.s32.totalorder %s23, 3
      %p125 = por %p123, %p124
      %p126 = scmp.ne.s32.totalorder %s117, %s118
      %p127 = scmp.eq.s32.totalorder %s23, 0
      %p128 = por %p126, %p127
      %p129 = scmp.ne.s32.totalorder %s117, %s118
      %p130 = scmp.eq.s32.totalorder %s24, 3
      %p131 = por %p129, %p130
      %p133 = scmp.ne.s32.totalorder %s118, %s132
      %p134 = scmp.eq.s32.totalorder %s24, 0
      %p135 = por %p133, %p134
      %s136 = ssub.s32 %s18, %s25
      %p137 = scmp.eq.s32.totalorder %s136, 0
      %s139 = sadd.s32 %s138, 1
      %s140 = scalar_select %p137, %s138, %s139
      %p143 = pneg %p137
      %p144 = scmp.eq.s32.totalorder %s18, 3
      %p145 = por %p143, %p144
      %p146 = scmp.ne.s32.totalorder %s138, %s141
      %p147 = scmp.eq.s32.totalorder %s18, 0
      %p148 = por %p146, %p147
      %p149 = scmp.ne.s32.totalorder %s138, %s141
      %p150 = scmp.eq.s32.totalorder %s23, 3
      %p151 = por %p149, %p150
      %p152 = scmp.ne.s32.totalorder %s141, %s142
      %p153 = scmp.eq.s32.totalorder %s23, 0
      %p154 = por %p152, %p153
      %p155 = scmp.ne.s32.totalorder %s141, %s142
      %p156 = scmp.eq.s32.totalorder %s24, 3
      %p157 = por %p155, %p156
      %p159 = scmp.ne.s32.totalorder %s142, %s158
      %p160 = scmp.eq.s32.totalorder %s24, 0
      %p161 = por %p159, %p160
      %p162 = scmp.le.s32.totalorder 1, %s18
      %p163 = scmp.lt.s32.totalorder %s18, 5
      %p164 = pnand %p162, %p163
      %p165 = pneg %p164
      // Predicated region
      $region9: #{tpu_custom_call.1} parent=5 // pred_check
        _
      $region10: #{tpu_custom_call.1} parent=5 // pred_check_branch
        %167 = sbr.rel (%p164) target = $region12
      $region11: #{tpu_custom_call.1} parent=5 // pred_region
        %s168 = ssub.s32 %s18, 1
        // Predicated region
        $region13: #{tpu_custom_call.1} parent=11 // pred_check
          %p169 = pneg %p65
        $region14: #{tpu_custom_call.1} parent=11 // pred_check_branch
          %171 = sbr.rel (%p169) target = $region16
        $region15: #{tpu_custom_call.1} parent=11 // pred_region
          %s173 = ssub.s32 2304, 2304
          %174 = vsyncadd [#allocation6], %s173
          %s175 = sshll.u32 [#allocation5], 4
          %s176 = int_to_ptr.vmem [resolvable:$true] %s175
          %181 = dma.hbm_to_vmem [thread:$0]  %s1, 2304, %s176, [#allocation6], 64, 64, 4
        $region16: #{tpu_custom_call.1} parent=11 // pred_fallthru
          _
        // Predicated region
        $region17: #{tpu_custom_call.1} parent=11 // pred_check
          %p182 = pneg %p86
        $region18: #{tpu_custom_call.1} parent=11 // pred_check_branch
          %184 = sbr.rel (%p182) target = $region20
        $region19: #{tpu_custom_call.1} parent=11 // pred_region
          _
        $region20: #{tpu_custom_call.1} parent=11 // pred_fallthru
          _
        // Predicated region
        $region21: #{tpu_custom_call.1} parent=11 // pred_check
          %p185 = pneg %p107
        $region22: #{tpu_custom_call.1} parent=11 // pred_check_branch
          %187 = sbr.rel (%p185) target = $region24
        $region23: #{tpu_custom_call.1} parent=11 // pred_region
          %s189 = ssub.s32 1024, 1024
          %190 = vsyncadd [#allocation6], %s189
          %s191 = sshll.u32 [#allocation7], 4
          %s192 = int_to_ptr.vmem [resolvable:$true] %s191
          %197 = dma.hbm_to_vmem [thread:$0]  %s3, 1024, %s192, [#allocation6], 64, 64, 4
        $region24: #{tpu_custom_call.1} parent=11 // pred_fallthru
          _
        // Predicated region
        $region25: #{tpu_custom_call.1} parent=11 // pred_check
          %p198 = pneg %p128
        $region26: #{tpu_custom_call.1} parent=11 // pred_check_branch
          %200 = sbr.rel (%p198) target = $region28
        $region27: #{tpu_custom_call.1} parent=11 // pred_region
          _
        $region28: #{tpu_custom_call.1} parent=11 // pred_fallthru
          _
      $region12: #{tpu_custom_call.1} parent=5 // pred_fallthru
        _
      %p201 = scmp.lt.s32.totalorder %s18, 4
      // Predicated region
      $region29: #{tpu_custom_call.1} parent=5 // pred_check
        %p202 = pneg %p201
      $region30: #{tpu_custom_call.1} parent=5 // pred_check_branch
        %204 = sbr.rel (%p202) target = $region32
      $region31: #{tpu_custom_call.1} parent=5 // pred_region
        // Predicated region
        $region33: #{tpu_custom_call.1} parent=31 // pred_check
          %p205 = pneg %p38
        $region34: #{tpu_custom_call.1} parent=31 // pred_check_branch
          %207 = sbr.rel (%p205) target = $region36
        $region35: #{tpu_custom_call.1} parent=31 // pred_region
          %s208 = sand.u32 %s28, 1
          %s209 = scalar_lea.sflag [#allocation3], %s208
          %s210 = sand.u32 %s28, 1
          %s211 = smul.addr %s210, 80
          %s212 = scalar_lea.vmem [#allocation2], %s211
          %s214 = ssub.s32 1280, 1280
          %215 = vsyncadd %s209, %s214
          %s216 = smul.addr %s18, 20
          %s217 = smul.addr %s216, 64
          %s218 = scalar_lea.hbm %s0, %s217
          %s219 = sshll.u32 %s212, 4
          %s220 = int_to_ptr.vmem [resolvable:$true] %s219
          %225 = dma.hbm_to_vmem [thread:$0]  %s218, 1280, %s220, %s209, 64, 64, 4
        $region36: #{tpu_custom_call.1} parent=31 // pred_fallthru
          _
      $region32: #{tpu_custom_call.1} parent=5 // pred_fallthru
        _
      %p226 = scmp.le.s32.totalorder 1, %s18
      %p227 = scmp.lt.s32.totalorder %s18, 5
      %p228 = pnand %p226, %p227
      %p229 = pneg %p228
      // Predicated region
      $region37: #{tpu_custom_call.1} parent=5 // pred_check
        _
      $region38: #{tpu_custom_call.1} parent=5 // pred_check_branch
        %231 = sbr.rel (%p228) target = $region40
      $region39: #{tpu_custom_call.1} parent=5 // pred_region
        %s232 = ssub.s32 %s18, 1
        %s233 = sand.u32 %s31, 1
        %s234 = scalar_lea.sflag [#allocation3], %s233
        %s235 = sand.u32 %s31, 1
        %s236 = smul.addr %s235, 80
        %s237 = scalar_lea.vmem [#allocation2], %s236
        // Predicated region
        $region41: #{tpu_custom_call.1} parent=39 // pred_check
          %p238 = pneg %p44
        $region42: #{tpu_custom_call.1} parent=39 // pred_check_branch
          %240 = sbr.rel (%p238) target = $region44
        $region43: #{tpu_custom_call.1} parent=39 // pred_region
          %241 = dma.done %s234, 1280
        $region44: #{tpu_custom_call.1} parent=39 // pred_fallthru
          _
        // Predicated region
        $region45: #{tpu_custom_call.1} parent=39 // pred_check
          %p242 = pneg %p65
        $region46: #{tpu_custom_call.1} parent=39 // pred_check_branch
          %244 = sbr.rel (%p242) target = $region48
        $region47: #{tpu_custom_call.1} parent=39 // pred_region
          %245 = dma.done [#allocation6], 2304
        $region48: #{tpu_custom_call.1} parent=39 // pred_fallthru
          _
        // Predicated region
        $region49: #{tpu_custom_call.1} parent=39 // pred_check
          %p246 = pneg %p107
        $region50: #{tpu_custom_call.1} parent=39 // pred_check_branch
          %248 = sbr.rel (%p246) target = $region52
        $region51: #{tpu_custom_call.1} parent=39 // pred_region
          %249 = dma.done [#allocation6], 1024
        $region52: #{tpu_custom_call.1} parent=39 // pred_fallthru
          _
        %s250 = sand.u32 %s31, 1
        %s251 = scalar_lea.sflag [#allocation3], %s250
        %s252 = sand.u32 %s31, 1
        %s253 = smul.addr %s252, 80
        %s254 = scalar_lea.vmem [#allocation2], %s253
        %p255 = pneg %p44
        %p256 = pneg %p41
        %p257 = pneg %p65
        %p258 = pneg %p62
        %p259 = pneg %p86
        %p260 = pneg %p83
        %p261 = pneg %p107
        %p262 = pneg %p104
        %p263 = pneg %p128
        %p264 = pneg %p125
        %p265 = pneg %p154
        %p266 = pneg %p151
        %s267 = sand.u32 %s141, 1
        %s268 = scalar_lea.sflag [#allocation4], %s267
        %s269 = sand.u32 %s141, 1
        %s270 = smul.addr %s269, 128
        %s271 = scalar_lea.vmem [#allocation8], %s270
        %s272 = smul.u32 16, %s23
        %v274 = vld [vmem:[%s237] sm:$0xf]
        %v275 = vld [vmem:[%s237 + $0x4] sm:$0xf]
        %v276 = vld [vmem:[%s237 + $0x8] sm:$0xf]
        %v277 = vld [vmem:[%s237 + $0xc] sm:$0xf]
        %v278 = vld [vmem:[%s237 + $0x10] sm:$0xf]
        %v279 = vld [vmem:[%s237 + $0x14] sm:$0xf]
        %v280 = vld [vmem:[%s237 + $0x18] sm:$0xf]
        %v281 = vld [vmem:[%s237 + $0x1c] sm:$0xf]
        %v282 = vld [vmem:[%s237 + $0x20] sm:$0xf]
        %v283 = vld [vmem:[%s237 + $0x24] sm:$0xf]
        %v284 = vld [vmem:[%s237 + $0x28] sm:$0xf]
        %v285 = vld [vmem:[%s237 + $0x2c] sm:$0xf]
        %v286 = vld [vmem:[%s237 + $0x30] sm:$0xf]
        %v287 = vld [vmem:[%s237 + $0x34] sm:$0xf]
        %v288 = vld [vmem:[%s237 + $0x38] sm:$0xf]
        %v289 = vld [vmem:[%s237 + $0x3c] sm:$0xf]
        %v290 = vld [vmem:[#allocation5] sm:$0xf]
        %v291 = vld [vmem:[#allocation5 + $0x4] sm:$0xf]
        %v292 = vld [vmem:[#allocation5 + $0x8] sm:$0xf]
        %v293 = vld [vmem:[#allocation5 + $0xc] sm:$0xf]
        %v294 = vld [vmem:[#allocation5 + $0x10] sm:$0xf]
        %v295 = vld [vmem:[#allocation5 + $0x14] sm:$0xf]
        %v296 = vld [vmem:[#allocation5 + $0x18] sm:$0xf]
        %v297 = vld [vmem:[#allocation5 + $0x1c] sm:$0xf]
        %v298 = vld [vmem:[#allocation5 + $0x20] sm:$0xf]
        %v299 = vld [vmem:[#allocation5 + $0x24] sm:$0xf]
        %v300 = vld [vmem:[#allocation5 + $0x28] sm:$0xf]
        %v301 = vld [vmem:[#allocation5 + $0x2c] sm:$0xf]
        %s302 = scalar_lea.vmem %s237, 8 [#allocation2]
        %v303 = vld [vmem:[%s302] sm:$0xf]
        %v304 = vld [vmem:[%s302 + $0x4] sm:$0xf]
        %v305 = vld [vmem:[%s302 + $0x8] sm:$0xf]
        %v306 = vld [vmem:[%s302 + $0xc] sm:$0xf]
        %v307 = vld [vmem:[%s302 + $0x10] sm:$0xf]
        %v308 = vld [vmem:[%s302 + $0x14] sm:$0xf]
        %v309 = vld [vmem:[%s302 + $0x18] sm:$0xf]
        %v310 = vld [vmem:[%s302 + $0x1c] sm:$0xf]
        %v311 = vld [vmem:[%s302 + $0x20] sm:$0xf]
        %v312 = vld [vmem:[%s302 + $0x24] sm:$0xf]
        %v313 = vld [vmem:[%s302 + $0x28] sm:$0xf]
        %v314 = vld [vmem:[%s302 + $0x2c] sm:$0xf]
        %v315 = vld [vmem:[%s302 + $0x30] sm:$0xf]
        %v316 = vld [vmem:[%s302 + $0x34] sm:$0xf]
        %v317 = vld [vmem:[%s302 + $0x38] sm:$0xf]
        %v318 = vld [vmem:[%s302 + $0x3c] sm:$0xf]
        %s319 = scalar_lea.vmem [#allocation5], 48
        %v320 = vld [vmem:[%s319] sm:$0xf]
        %v321 = vld [vmem:[%s319 + $0x4] sm:$0xf]
        %v322 = vld [vmem:[%s319 + $0x8] sm:$0xf]
        %v323 = vld [vmem:[%s319 + $0xc] sm:$0xf]
        %v324 = vld [vmem:[%s319 + $0x10] sm:$0xf]
        %v325 = vld [vmem:[%s319 + $0x14] sm:$0xf]
        %v326 = vld [vmem:[%s319 + $0x18] sm:$0xf]
        %v327 = vld [vmem:[%s319 + $0x1c] sm:$0xf]
        %v328 = vld [vmem:[%s319 + $0x20] sm:$0xf]
        %v329 = vld [vmem:[%s319 + $0x24] sm:$0xf]
        %v330 = vld [vmem:[%s319 + $0x28] sm:$0xf]
        %v331 = vld [vmem:[%s319 + $0x2c] sm:$0xf]
        %v348 = vunpack.c.l.b16 %v303
        %v349 = vunpack.c.l.b16 %v304
        %v350 = vunpack.c.l.b16 %v305
        %v351 = vunpack.c.l.b16 %v306
        %v352 = vunpack.c.l.b16 %v307
        %v353 = vunpack.c.l.b16 %v308
        %v354 = vunpack.c.l.b16 %v309
        %v355 = vunpack.c.l.b16 %v310
        %v356 = vunpack.c.l.b16 %v311
        %v357 = vunpack.c.l.b16 %v312
        %v358 = vunpack.c.l.b16 %v313
        %v359 = vunpack.c.l.b16 %v314
        %v360 = vunpack.c.l.b16 %v315
        %v361 = vunpack.c.l.b16 %v316
        %v362 = vunpack.c.l.b16 %v317
        %v363 = vunpack.c.l.b16 %v318
        %v364 = vpack.c.b16 %v349, %v348
        %v365 = vpack.c.b16 %v351, %v350
        %v366 = vpack.c.b16 %v353, %v352
        %v367 = vpack.c.b16 %v355, %v354
        %v368 = vpack.c.b16 %v357, %v356
        %v369 = vpack.c.b16 %v359, %v358
        %v370 = vpack.c.b16 %v361, %v360
        %v371 = vpack.c.b16 %v363, %v362
        %v384 = vunpack.c.l.b16 %v320
        %v385 = vunpack.c.l.b16 %v321
        %v386 = vunpack.c.l.b16 %v322
        %v387 = vunpack.c.l.b16 %v323
        %v388 = vunpack.c.l.b16 %v324
        %v389 = vunpack.c.l.b16 %v325
        %v390 = vunpack.c.l.b16 %v326
        %v391 = vunpack.c.l.b16 %v327
        %v392 = vunpack.c.l.b16 %v328
        %v393 = vunpack.c.l.b16 %v329
        %v394 = vunpack.c.l.b16 %v330
        %v395 = vunpack.c.l.b16 %v331
        %v396 = vpack.c.b16 %v385, %v384
        %v397 = vpack.c.b16 %v387, %v386
        %v398 = vpack.c.b16 %v389, %v388
        %v399 = vpack.c.b16 %v391, %v390
        %v400 = vpack.c.b16 %v393, %v392
        %v401 = vpack.c.b16 %v395, %v394
        %vm408 = vcmask 785408
        %v410 = vsel %vm408, %v364, 0
        %v413 = vsel %vm408, %v365, 0
        %v416 = vsel %vm408, %v366, 0
        %v419 = vsel %vm408, %v367, 0
        %v422 = vsel %vm408, %v368, 0
        %v425 = vsel %vm408, %v369, 0
        %v428 = vsel %vm408, %v370, 0
        %v431 = vsel %vm408, %v371, 0
        %433 = vmatprep.subr.bf16.mxu0 0
        %434 = vmatpush1.bf16.msra.mxu0 %v396
        %435 = vmatprep.subr.bf16.mxu0 0
        %436 = vmatpush1.bf16.msra.mxu0 %v397
        %437 = vmatprep.subr.bf16.mxu0 0
        %438 = vmatpush1.bf16.msra.mxu0 %v398
        %439 = vmatprep.subr.bf16.mxu0 0
        %440 = vmatpush1.bf16.msra.mxu0 %v399
        %441 = vmatprep.subr.bf16.mxu0 0
        %442 = vmatpush1.bf16.msra.mxu0 %v400
        %443 = vmatprep.subr.bf16.mxu0 0
        %444 = vmatpush1.bf16.msra.mxu0 %v401
        %445 = vmatprep.subr.bf16.mxu0 0
        %446 = vmatpush1.bf16.msra.mxu0 0
        %447 = vmatprep.subr.bf16.mxu0 0
        %448 = vmatpush1.bf16.msra.mxu0 0
        %449 = vmatprep.subr.bf16.mxu0 0
        %450 = vmatpush1.bf16.msra.mxu0 0
        %451 = vmatprep.subr.bf16.mxu0 0
        %452 = vmatpush1.bf16.msra.mxu0 0
        %453 = vmatprep.subr.bf16.mxu0 0
        %454 = vmatpush1.bf16.msra.mxu0 0
        %455 = vmatprep.subr.bf16.mxu0 0
        %456 = vmatpush1.bf16.msra.mxu0 0
        %457 = vmatprep.subr.bf16.mxu0 0
        %458 = vmatpush1.bf16.msra.mxu0 0
        %459 = vmatprep.subr.bf16.mxu0 0
        %460 = vmatpush1.bf16.msra.mxu0 0
        %461 = vmatprep.subr.bf16.mxu0 0
        %462 = vmatpush1.bf16.msra.mxu0 0
        %463 = vmatprep.subr.bf16.mxu0 0
        %464 = vmatpush1.bf16.msra.mxu0 0
        %465 = vmatprep.mubr.bf16.mxu0 0
        %466 = vmatmul.mubr.bf16.gmra.mrb[0].mxu0 %v410
        %v467 = vpop.f32.mrb[0].mxu0
        %v468 = vadd.f32 0.0, %v467
        %v469 = vpop.f32.mrb[0].mxu0
        %v470 = vpop.f32.mrb[0].mxu0
        %v471 = vadd.f32 0.0, %v470
        %v472 = vpop.f32.mrb[0].mxu0
        %473 = vmatprep.mubr.bf16.mxu0 0
        %474 = vmatmul.mubr.bf16.gmra.mrb[0].mxu0 %v413
        %v475 = vpop.f32.mrb[0].mxu0
        %v476 = vadd.f32 0.0, %v475
        %v477 = vpop.f32.mrb[0].mxu0
        %v478 = vpop.f32.mrb[0].mxu0
        %v479 = vadd.f32 0.0, %v478
        %v480 = vpop.f32.mrb[0].mxu0
        %481 = vmatprep.mubr.bf16.mxu0 0
        %482 = vmatmul.mubr.bf16.gmra.mrb[0].mxu0 %v416
        %v483 = vpop.f32.mrb[0].mxu0
        %v484 = vadd.f32 0.0, %v483
        %v485 = vpop.f32.mrb[0].mxu0
        %v486 = vpop.f32.mrb[0].mxu0
        %v487 = vadd.f32 0.0, %v486
        %v488 = vpop.f32.mrb[0].mxu0
        %489 = vmatprep.mubr.bf16.mxu0 0
        %490 = vmatmul.mubr.bf16.gmra.mrb[0].mxu0 %v419
        %v491 = vpop.f32.mrb[0].mxu0
        %v492 = vadd.f32 0.0, %v491
        %v493 = vpop.f32.mrb[0].mxu0
        %v494 = vpop.f32.mrb[0].mxu0
        %v495 = vadd.f32 0.0, %v494
        %v496 = vpop.f32.mrb[0].mxu0
        %497 = vmatprep.mubr.bf16.mxu0 0
        %498 = vmatmul.mubr.bf16.gmra.mrb[0].mxu0 %v422
        %v499 = vpop.f32.mrb[0].mxu0
        %v500 = vadd.f32 0.0, %v499
        %v501 = vpop.f32.mrb[0].mxu0
        %v502 = vpop.f32.mrb[0].mxu0
        %v503 = vadd.f32 0.0, %v502
        %v504 = vpop.f32.mrb[0].mxu0
        %505 = vmatprep.mubr.bf16.mxu0 0
        %506 = vmatmul.mubr.bf16.gmra.mrb[0].mxu0 %v425
        %v507 = vpop.f32.mrb[0].mxu0
        %v508 = vadd.f32 0.0, %v507
        %v509 = vpop.f32.mrb[0].mxu0
        %v510 = vpop.f32.mrb[0].mxu0
        %v511 = vadd.f32 0.0, %v510
        %v512 = vpop.f32.mrb[0].mxu0
        %513 = vmatprep.mubr.bf16.mxu0 0
        %514 = vmatmul.mubr.bf16.gmra.mrb[0].mxu0 %v428
        %v515 = vpop.f32.mrb[0].mxu0
        %v516 = vadd.f32 0.0, %v515
        %v517 = vpop.f32.mrb[0].mxu0
        %v518 = vpop.f32.mrb[0].mxu0
        %v519 = vadd.f32 0.0, %v518
        %v520 = vpop.f32.mrb[0].mxu0
        %521 = vmatprep.mubr.bf16.mxu0 0
        %522 = vmatmul.mubr.bf16.gmra.mrb[0].mxu0 %v431
        %v523 = vpop.f32.mrb[0].mxu0
        %v524 = vadd.f32 0.0, %v523
        %v525 = vpop.f32.mrb[0].mxu0
        %v526 = vpop.f32.mrb[0].mxu0
        %v527 = vadd.f32 0.0, %v526
        %v528 = vpop.f32.mrb[0].mxu0
        %529 = vdwg.mxu0
        %v546 = vunpack.c.l.b16 %v274
        %v547 = vunpack.c.l.b16 %v275
        %v548 = vunpack.c.l.b16 %v276
        %v549 = vunpack.c.l.b16 %v277
        %v550 = vunpack.c.l.b16 %v278
        %v551 = vunpack.c.l.b16 %v279
        %v552 = vunpack.c.l.b16 %v280
        %v553 = vunpack.c.l.b16 %v281
        %v554 = vunpack.c.l.b16 %v282
        %v555 = vunpack.c.l.b16 %v283
        %v556 = vunpack.c.l.b16 %v284
        %v557 = vunpack.c.l.b16 %v285
        %v558 = vunpack.c.l.b16 %v286
        %v559 = vunpack.c.l.b16 %v287
        %v560 = vunpack.c.l.b16 %v288
        %v561 = vunpack.c.l.b16 %v289
        %v562 = vpack.c.b16 %v547, %v546
        %v563 = vpack.c.b16 %v549, %v548
        %v564 = vpack.c.b16 %v551, %v550
        %v565 = vpack.c.b16 %v553, %v552
        %v566 = vpack.c.b16 %v555, %v554
        %v567 = vpack.c.b16 %v557, %v556
        %v568 = vpack.c.b16 %v559, %v558
        %v569 = vpack.c.b16 %v561, %v560
        %v582 = vunpack.c.l.b16 %v290
        %v583 = vunpack.c.l.b16 %v291
        %v584 = vunpack.c.l.b16 %v292
        %v585 = vunpack.c.l.b16 %v293
        %v586 = vunpack.c.l.b16 %v294
        %v587 = vunpack.c.l.b16 %v295
        %v588 = vunpack.c.l.b16 %v296
        %v589 = vunpack.c.l.b16 %v297
        %v590 = vunpack.c.l.b16 %v298
        %v591 = vunpack.c.l.b16 %v299
        %v592 = vunpack.c.l.b16 %v300
        %v593 = vunpack.c.l.b16 %v301
        %v594 = vpack.c.b16 %v583, %v582
        %v595 = vpack.c.b16 %v585, %v584
        %v596 = vpack.c.b16 %v587, %v586
        %v597 = vpack.c.b16 %v589, %v588
        %v598 = vpack.c.b16 %v591, %v590
        %v599 = vpack.c.b16 %v593, %v592
        %v607 = vsel %vm408, %v562, 0
        %v610 = vsel %vm408, %v563, 0
        %v613 = vsel %vm408, %v564, 0
        %v616 = vsel %vm408, %v565, 0
        %v619 = vsel %vm408, %v566, 0
        %v622 = vsel %vm408, %v567, 0
        %v625 = vsel %vm408, %v568, 0
        %v628 = vsel %vm408, %v569, 0
        %630 = vmatprep.subr.bf16.mxu0 0
        %631 = vmatpush1.bf16.msra.mxu0 %v594
        %632 = vmatprep.subr.bf16.mxu0 0
        %633 = vmatpush1.bf16.msra.mxu0 %v595
        %634 = vmatprep.subr.bf16.mxu0 0
        %635 = vmatpush1.bf16.msra.mxu0 %v596
        %636 = vmatprep.subr.bf16.mxu0 0
        %637 = vmatpush1.bf16.msra.mxu0 %v597
        %638 = vmatprep.subr.bf16.mxu0 0
        %639 = vmatpush1.bf16.msra.mxu0 %v598
        %640 = vmatprep.subr.bf16.mxu0 0
        %641 = vmatpush1.bf16.msra.mxu0 %v599
        %642 = vmatprep.subr.bf16.mxu0 0
        %643 = vmatpush1.bf16.msra.mxu0 0
        %644 = vmatprep.subr.bf16.mxu0 0
        %645 = vmatpush1.bf16.msra.mxu0 0
        %646 = vmatprep.subr.bf16.mxu0 0
        %647 = vmatpush1.bf16.msra.mxu0 0
        %648 = vmatprep.subr.bf16.mxu0 0
        %649 = vmatpush1.bf16.msra.mxu0 0
        %650 = vmatprep.subr.bf16.mxu0 0
        %651 = vmatpush1.bf16.msra.mxu0 0
        %652 = vmatprep.subr.bf16.mxu0 0
        %653 = vmatpush1.bf16.msra.mxu0 0
        %654 = vmatprep.subr.bf16.mxu0 0
        %655 = vmatpush1.bf16.msra.mxu0 0
        %656 = vmatprep.subr.bf16.mxu0 0
        %657 = vmatpush1.bf16.msra.mxu0 0
        %658 = vmatprep.subr.bf16.mxu0 0
        %659 = vmatpush1.bf16.msra.mxu0 0
        %660 = vmatprep.subr.bf16.mxu0 0
        %661 = vmatpush1.bf16.msra.mxu0 0
        %662 = vmatprep.mubr.bf16.mxu0 0
        %663 = vmatmul.mubr.bf16.gmra.mrb[0].mxu0 %v607
        %v664 = vpop.f32.mrb[0].mxu0
        %v665 = vadd.f32 %v468, %v664
        %v666 = vpop.f32.mrb[0].mxu0
        %v667 = vpop.f32.mrb[0].mxu0
        %v668 = vadd.f32 %v471, %v667
        %v669 = vpop.f32.mrb[0].mxu0
        %670 = vmatprep.mubr.bf16.mxu0 0
        %671 = vmatmul.mubr.bf16.gmra.mrb[0].mxu0 %v610
        %v672 = vpop.f32.mrb[0].mxu0
        %v673 = vadd.f32 %v476, %v672
        %v674 = vpop.f32.mrb[0].mxu0
        %v675 = vpop.f32.mrb[0].mxu0
        %v676 = vadd.f32 %v479, %v675
        %v677 = vpop.f32.mrb[0].mxu0
        %678 = vmatprep.mubr.bf16.mxu0 0
        %679 = vmatmul.mubr.bf16.gmra.mrb[0].mxu0 %v613
        %v680 = vpop.f32.mrb[0].mxu0
        %v681 = vadd.f32 %v484, %v680
        %v682 = vpop.f32.mrb[0].mxu0
        %v683 = vpop.f32.mrb[0].mxu0
        %v684 = vadd.f32 %v487, %v683
        %v685 = vpop.f32.mrb[0].mxu0
        %686 = vmatprep.mubr.bf16.mxu0 0
        %687 = vmatmul.mubr.bf16.gmra.mrb[0].mxu0 %v616
        %v688 = vpop.f32.mrb[0].mxu0
        %v689 = vadd.f32 %v492, %v688
        %v690 = vpop.f32.mrb[0].mxu0
        %v691 = vpop.f32.mrb[0].mxu0
        %v692 = vadd.f32 %v495, %v691
        %v693 = vpop.f32.mrb[0].mxu0
        %694 = vmatprep.mubr.bf16.mxu0 0
        %695 = vmatmul.mubr.bf16.gmra.mrb[0].mxu0 %v619
        %v696 = vpop.f32.mrb[0].mxu0
        %v697 = vadd.f32 %v500, %v696
        %v698 = vpop.f32.mrb[0].mxu0
        %v699 = vpop.f32.mrb[0].mxu0
        %v700 = vadd.f32 %v503, %v699
        %v701 = vpop.f32.mrb[0].mxu0
        %702 = vmatprep.mubr.bf16.mxu0 0
        %703 = vmatmul.mubr.bf16.gmra.mrb[0].mxu0 %v622
        %v704 = vpop.f32.mrb[0].mxu0
        %v705 = vadd.f32 %v508, %v704
        %v706 = vpop.f32.mrb[0].mxu0
        %v707 = vpop.f32.mrb[0].mxu0
        %v708 = vadd.f32 %v511, %v707
        %v709 = vpop.f32.mrb[0].mxu0
        %710 = vmatprep.mubr.bf16.mxu0 0
        %711 = vmatmul.mubr.bf16.gmra.mrb[0].mxu0 %v625
        %v712 = vpop.f32.mrb[0].mxu0
        %v713 = vadd.f32 %v516, %v712
        %v714 = vpop.f32.mrb[0].mxu0
        %v715 = vpop.f32.mrb[0].mxu0
        %v716 = vadd.f32 %v519, %v715
        %v717 = vpop.f32.mrb[0].mxu0
        %718 = vmatprep.mubr.bf16.mxu0 0
        %719 = vmatmul.mubr.bf16.gmra.mrb[0].mxu0 %v628
        %v720 = vpop.f32.mrb[0].mxu0
        %v721 = vadd.f32 %v524, %v720
        %v722 = vpop.f32.mrb[0].mxu0
        %v723 = vpop.f32.mrb[0].mxu0
        %v724 = vadd.f32 %v527, %v723
        %v725 = vpop.f32.mrb[0].mxu0
        %726 = vdwg.mxu0
        %s727 = scalar_lea.vmem %s237, 16 [#allocation2]
        %v728 = vld [vmem:[%s727] sm:$0xf]
        %v729 = vld [vmem:[%s727 + $0x4] sm:$0xf]
        %v730 = vld [vmem:[%s727 + $0x8] sm:$0xf]
        %v731 = vld [vmem:[%s727 + $0xc] sm:$0xf]
        %v732 = vld [vmem:[%s727 + $0x10] sm:$0xf]
        %v733 = vld [vmem:[%s727 + $0x14] sm:$0xf]
        %v734 = vld [vmem:[%s727 + $0x18] sm:$0xf]
        %v735 = vld [vmem:[%s727 + $0x1c] sm:$0xf]
        %v736 = vld [vmem:[%s727 + $0x20] sm:$0xf]
        %v737 = vld [vmem:[%s727 + $0x24] sm:$0xf]
        %v738 = vld [vmem:[%s727 + $0x28] sm:$0xf]
        %v739 = vld [vmem:[%s727 + $0x2c] sm:$0xf]
        %v740 = vld [vmem:[%s727 + $0x30] sm:$0xf]
        %v741 = vld [vmem:[%s727 + $0x34] sm:$0xf]
        %v742 = vld [vmem:[%s727 + $0x38] sm:$0xf]
        %v743 = vld [vmem:[%s727 + $0x3c] sm:$0xf]
        %s744 = scalar_lea.vmem [#allocation5], 96
        %v745 = vld [vmem:[%s744] sm:$0xf]
        %v746 = vld [vmem:[%s744 + $0x4] sm:$0xf]
        %v747 = vld [vmem:[%s744 + $0x8] sm:$0xf]
        %v748 = vld [vmem:[%s744 + $0xc] sm:$0xf]
        %v749 = vld [vmem:[%s744 + $0x10] sm:$0xf]
        %v750 = vld [vmem:[%s744 + $0x14] sm:$0xf]
        %v751 = vld [vmem:[%s744 + $0x18] sm:$0xf]
        %v752 = vld [vmem:[%s744 + $0x1c] sm:$0xf]
        %v753 = vld [vmem:[%s744 + $0x20] sm:$0xf]
        %v754 = vld [vmem:[%s744 + $0x24] sm:$0xf]
        %v755 = vld [vmem:[%s744 + $0x28] sm:$0xf]
        %v756 = vld [vmem:[%s744 + $0x2c] sm:$0xf]
        %v773 = vunpack.c.l.b16 %v728
        %v774 = vunpack.c.l.b16 %v729
        %v775 = vunpack.c.l.b16 %v730
        %v776 = vunpack.c.l.b16 %v731
        %v777 = vunpack.c.l.b16 %v732
        %v778 = vunpack.c.l.b16 %v733
        %v779 = vunpack.c.l.b16 %v734
        %v780 = vunpack.c.l.b16 %v735
        %v781 = vunpack.c.l.b16 %v736
        %v782 = vunpack.c.l.b16 %v737
        %v783 = vunpack.c.l.b16 %v738
        %v784 = vunpack.c.l.b16 %v739
        %v785 = vunpack.c.l.b16 %v740
        %v786 = vunpack.c.l.b16 %v741
        %v787 = vunpack.c.l.b16 %v742
        %v788 = vunpack.c.l.b16 %v743
        %v789 = vpack.c.b16 %v774, %v773
        %v790 = vpack.c.b16 %v776, %v775
        %v791 = vpack.c.b16 %v778, %v777
        %v792 = vpack.c.b16 %v780, %v779
        %v793 = vpack.c.b16 %v782, %v781
        %v794 = vpack.c.b16 %v784, %v783
        %v795 = vpack.c.b16 %v786, %v785
        %v796 = vpack.c.b16 %v788, %v787
        %v809 = vunpack.c.l.b16 %v745
        %v810 = vunpack.c.l.b16 %v746
        %v811 = vunpack.c.l.b16 %v747
        %v812 = vunpack.c.l.b16 %v748
        %v813 = vunpack.c.l.b16 %v749
        %v814 = vunpack.c.l.b16 %v750
        %v815 = vunpack.c.l.b16 %v751
        %v816 = vunpack.c.l.b16 %v752
        %v817 = vunpack.c.l.b16 %v753
        %v818 = vunpack.c.l.b16 %v754
        %v819 = vunpack.c.l.b16 %v755
        %v820 = vunpack.c.l.b16 %v756
        %v821 = vpack.c.b16 %v810, %v809
        %v822 = vpack.c.b16 %v812, %v811
        %v823 = vpack.c.b16 %v814, %v813
        %v824 = vpack.c.b16 %v816, %v815
        %v825 = vpack.c.b16 %v818, %v817
        %v826 = vpack.c.b16 %v820, %v819
        %v834 = vsel %vm408, %v789, 0
        %v837 = vsel %vm408, %v790, 0
        %v840 = vsel %vm408, %v791, 0
        %v843 = vsel %vm408, %v792, 0
        %v846 = vsel %vm408, %v793, 0
        %v849 = vsel %vm408, %v794, 0
        %v852 = vsel %vm408, %v795, 0
        %v855 = vsel %vm408, %v796, 0
        %857 = vmatprep.subr.bf16.mxu0 0
        %858 = vmatpush1.bf16.msra.mxu0 %v821
        %859 = vmatprep.subr.bf16.mxu0 0
        %860 = vmatpush1.bf16.msra.mxu0 %v822
        %861 = vmatprep.subr.bf16.mxu0 0
        %862 = vmatpush1.bf16.msra.mxu0 %v823
        %863 = vmatprep.subr.bf16.mxu0 0
        %864 = vmatpush1.bf16.msra.mxu0 %v824
        %865 = vmatprep.subr.bf16.mxu0 0
        %866 = vmatpush1.bf16.msra.mxu0 %v825
        %867 = vmatprep.subr.bf16.mxu0 0
        %868 = vmatpush1.bf16.msra.mxu0 %v826
        %869 = vmatprep.subr.bf16.mxu0 0
        %870 = vmatpush1.bf16.msra.mxu0 0
        %871 = vmatprep.subr.bf16.mxu0 0
        %872 = vmatpush1.bf16.msra.mxu0 0
        %873 = vmatprep.subr.bf16.mxu0 0
        %874 = vmatpush1.bf16.msra.mxu0 0
        %875 = vmatprep.subr.bf16.mxu0 0
        %876 = vmatpush1.bf16.msra.mxu0 0
        %877 = vmatprep.subr.bf16.mxu0 0
        %878 = vmatpush1.bf16.msra.mxu0 0
        %879 = vmatprep.subr.bf16.mxu0 0
        %880 = vmatpush1.bf16.msra.mxu0 0
        %881 = vmatprep.subr.bf16.mxu0 0
        %882 = vmatpush1.bf16.msra.mxu0 0
        %883 = vmatprep.subr.bf16.mxu0 0
        %884 = vmatpush1.bf16.msra.mxu0 0
        %885 = vmatprep.subr.bf16.mxu0 0
        %886 = vmatpush1.bf16.msra.mxu0 0
        %887 = vmatprep.subr.bf16.mxu0 0
        %888 = vmatpush1.bf16.msra.mxu0 0
        %889 = vmatprep.mubr.bf16.mxu0 0
        %890 = vmatmul.mubr.bf16.gmra.mrb[0].mxu0 %v834
        %v891 = vpop.f32.mrb[0].mxu0
        %v892 = vadd.f32 0.0, %v891
        %v893 = vpop.f32.mrb[0].mxu0
        %v894 = vpop.f32.mrb[0].mxu0
        %v895 = vadd.f32 0.0, %v894
        %v896 = vpop.f32.mrb[0].mxu0
        %897 = vmatprep.mubr.bf16.mxu0 0
        %898 = vmatmul.mubr.bf16.gmra.mrb[0].mxu0 %v837
        %v899 = vpop.f32.mrb[0].mxu0
        %v900 = vadd.f32 0.0, %v899
        %v901 = vpop.f32.mrb[0].mxu0
        %v902 = vpop.f32.mrb[0].mxu0
        %v903 = vadd.f32 0.0, %v902
        %v904 = vpop.f32.mrb[0].mxu0
        %905 = vmatprep.mubr.bf16.mxu0 0
        %906 = vmatmul.mubr.bf16.gmra.mrb[0].mxu0 %v840
        %v907 = vpop.f32.mrb[0].mxu0
        %v908 = vadd.f32 0.0, %v907
        %v909 = vpop.f32.mrb[0].mxu0
        %v910 = vpop.f32.mrb[0].mxu0
        %v911 = vadd.f32 0.0, %v910
        %v912 = vpop.f32.mrb[0].mxu0
        %913 = vmatprep.mubr.bf16.mxu0 0
        %914 = vmatmul.mubr.bf16.gmra.mrb[0].mxu0 %v843
        %v915 = vpop.f32.mrb[0].mxu0
        %v916 = vadd.f32 0.0, %v915
        %v917 = vpop.f32.mrb[0].mxu0
        %v918 = vpop.f32.mrb[0].mxu0
        %v919 = vadd.f32 0.0, %v918
        %v920 = vpop.f32.mrb[0].mxu0
        %921 = vmatprep.mubr.bf16.mxu0 0
        %922 = vmatmul.mubr.bf16.gmra.mrb[0].mxu0 %v846
        %v923 = vpop.f32.mrb[0].mxu0
        %v924 = vadd.f32 0.0, %v923
        %v925 = vpop.f32.mrb[0].mxu0
        %v926 = vpop.f32.mrb[0].mxu0
        %v927 = vadd.f32 0.0, %v926
        %v928 = vpop.f32.mrb[0].mxu0
        %929 = vmatprep.mubr.bf16.mxu0 0
        %930 = vmatmul.mubr.bf16.gmra.mrb[0].mxu0 %v849
        %v931 = vpop.f32.mrb[0].mxu0
        %v932 = vadd.f32 0.0, %v931
        %v933 = vpop.f32.mrb[0].mxu0
        %v934 = vpop.f32.mrb[0].mxu0
        %v935 = vadd.f32 0.0, %v934
        %v936 = vpop.f32.mrb[0].mxu0
        %937 = vmatprep.mubr.bf16.mxu0 0
        %938 = vmatmul.mubr.bf16.gmra.mrb[0].mxu0 %v852
        %v939 = vpop.f32.mrb[0].mxu0
        %v940 = vadd.f32 0.0, %v939
        %v941 = vpop.f32.mrb[0].mxu0
        %v942 = vpop.f32.mrb[0].mxu0
        %v943 = vadd.f32 0.0, %v942
        %v944 = vpop.f32.mrb[0].mxu0
        %945 = vmatprep.mubr.bf16.mxu0 0
        %946 = vmatmul.mubr.bf16.gmra.mrb[0].mxu0 %v855
        %v947 = vpop.f32.mrb[0].mxu0
        %v948 = vadd.f32 0.0, %v947
        %v949 = vpop.f32.mrb[0].mxu0
        %v950 = vpop.f32.mrb[0].mxu0
        %v951 = vadd.f32 0.0, %v950
        %v952 = vpop.f32.mrb[0].mxu0
        %953 = vdwg.mxu0
        %v954 = vadd.f32 %v665, %v892
        %v955 = vadd.f32 %v668, %v895
        %v956 = vadd.f32 %v673, %v900
        %v957 = vadd.f32 %v676, %v903
        %v958 = vadd.f32 %v681, %v908
        %v959 = vadd.f32 %v684, %v911
        %v960 = vadd.f32 %v689, %v916
        %v961 = vadd.f32 %v692, %v919
        %v962 = vadd.f32 %v697, %v924
        %v963 = vadd.f32 %v700, %v927
        %v964 = vadd.f32 %v705, %v932
        %v965 = vadd.f32 %v708, %v935
        %v966 = vadd.f32 %v713, %v940
        %v967 = vadd.f32 %v716, %v943
        %v968 = vadd.f32 %v721, %v948
        %v969 = vadd.f32 %v724, %v951
        %v970 = vld [vmem:[%s2] sm:$0x1]
        %v972 = vlaneseq
        %v973 = vshrl.u32 %v972, 7
        %v974 = vsub.s32 0, %v973
        %v975 = vrot.slane %v970, %v974
        %v977 = vadd.f32 %v954, %v975
        %v978 = vadd.f32 %v955, %v975
        %v979 = vadd.f32 %v956, %v975
        %v980 = vadd.f32 %v957, %v975
        %v981 = vadd.f32 %v958, %v975
        %v982 = vadd.f32 %v959, %v975
        %v983 = vadd.f32 %v960, %v975
        %v984 = vadd.f32 %v961, %v975
        %v985 = vadd.f32 %v962, %v975
        %v986 = vadd.f32 %v963, %v975
        %v987 = vadd.f32 %v964, %v975
        %v988 = vadd.f32 %v965, %v975
        %v989 = vadd.f32 %v966, %v975
        %v990 = vadd.f32 %v967, %v975
        %v991 = vadd.f32 %v968, %v975
        %v992 = vadd.f32 %v969, %v975
        %v993 = vmax.f32 %v977, 0.0
        %v994 = vmax.f32 %v978, 0.0
        %v995 = vmax.f32 %v979, 0.0
        %v996 = vmax.f32 %v980, 0.0
        %v997 = vmax.f32 %v981, 0.0
        %v998 = vmax.f32 %v982, 0.0
        %v999 = vmax.f32 %v983, 0.0
        %v1000 = vmax.f32 %v984, 0.0
        %v1001 = vmax.f32 %v985, 0.0
        %v1002 = vmax.f32 %v986, 0.0
        %v1003 = vmax.f32 %v987, 0.0
        %v1004 = vmax.f32 %v988, 0.0
        %v1005 = vmax.f32 %v989, 0.0
        %v1006 = vmax.f32 %v990, 0.0
        %v1007 = vmax.f32 %v991, 0.0
        %v1008 = vmax.f32 %v992, 0.0
        %v1009 = vpack.c.bf16 %v994, %v993
        %v1010 = vpack.c.bf16 %v996, %v995
        %v1011 = vpack.c.bf16 %v998, %v997
        %v1012 = vpack.c.bf16 %v1000, %v999
        %v1013 = vpack.c.bf16 %v1002, %v1001
        %v1014 = vpack.c.bf16 %v1004, %v1003
        %v1015 = vpack.c.bf16 %v1006, %v1005
        %v1016 = vpack.c.bf16 %v1008, %v1007
        %v1017 = vld [vmem:[#allocation7] sm:$0xf]
        %v1018 = vld [vmem:[#allocation7 + $0x4] sm:$0xf]
        %v1019 = vld [vmem:[#allocation7 + $0x8] sm:$0xf]
        %v1020 = vld [vmem:[#allocation7 + $0xc] sm:$0xf]
        %v1021 = vld [vmem:[#allocation7 + $0x10] sm:$0xf]
        %v1022 = vld [vmem:[#allocation7 + $0x14] sm:$0xf]
        %v1023 = vld [vmem:[#allocation7 + $0x18] sm:$0xf]
        %v1024 = vld [vmem:[#allocation7 + $0x1c] sm:$0xf]
        %v1025 = vld [vmem:[#allocation7 + $0x20] sm:$0xf]
        %v1026 = vld [vmem:[#allocation7 + $0x24] sm:$0xf]
        %v1027 = vld [vmem:[#allocation7 + $0x28] sm:$0xf]
        %v1028 = vld [vmem:[#allocation7 + $0x2c] sm:$0xf]
        %v1029 = vld [vmem:[#allocation7 + $0x30] sm:$0xf]
        %v1030 = vld [vmem:[#allocation7 + $0x34] sm:$0xf]
        %v1031 = vld [vmem:[#allocation7 + $0x38] sm:$0xf]
        %v1032 = vld [vmem:[#allocation7 + $0x3c] sm:$0xf]
        %v1033 = vld [vmem:[%s4] sm:$0x1]
        %v1035 = vlaneseq
        %v1036 = vshrl.u32 %v1035, 7
        %v1037 = vsub.s32 0, %v1036
        %v1038 = vrot.slane %v1033, %v1037
        %v1056 = vunpack.c.l.b16 %v1017
        %v1057 = vunpack.c.l.b16 %v1018
        %v1058 = vunpack.c.l.b16 %v1019
        %v1059 = vunpack.c.l.b16 %v1020
        %v1060 = vunpack.c.l.b16 %v1021
        %v1061 = vunpack.c.l.b16 %v1022
        %v1062 = vunpack.c.l.b16 %v1023
        %v1063 = vunpack.c.l.b16 %v1024
        %v1064 = vunpack.c.l.b16 %v1025
        %v1065 = vunpack.c.l.b16 %v1026
        %v1066 = vunpack.c.l.b16 %v1027
        %v1067 = vunpack.c.l.b16 %v1028
        %v1068 = vunpack.c.l.b16 %v1029
        %v1069 = vunpack.c.l.b16 %v1030
        %v1070 = vunpack.c.l.b16 %v1031
        %v1071 = vunpack.c.l.b16 %v1032
        %v1072 = vpack.c.b16 %v1057, %v1056
        %v1073 = vpack.c.b16 %v1059, %v1058
        %v1074 = vpack.c.b16 %v1061, %v1060
        %v1075 = vpack.c.b16 %v1063, %v1062
        %v1076 = vpack.c.b16 %v1065, %v1064
        %v1077 = vpack.c.b16 %v1067, %v1066
        %v1078 = vpack.c.b16 %v1069, %v1068
        %v1079 = vpack.c.b16 %v1071, %v1070
        %1088 = vmatprep.subr.bf16.mxu0 0
        %1089 = vmatpush1.bf16.msra.mxu0 %v1072
        %1090 = vmatprep.subr.bf16.mxu0 0
        %1091 = vmatpush1.bf16.msra.mxu0 %v1073
        %1092 = vmatprep.subr.bf16.mxu0 0
        %1093 = vmatpush1.bf16.msra.mxu0 %v1074
        %1094 = vmatprep.subr.bf16.mxu0 0
        %1095 = vmatpush1.bf16.msra.mxu0 %v1075
        %1096 = vmatprep.subr.bf16.mxu0 0
        %1097 = vmatpush1.bf16.msra.mxu0 %v1076
        %1098 = vmatprep.subr.bf16.mxu0 0
        %1099 = vmatpush1.bf16.msra.mxu0 %v1077
        %1100 = vmatprep.subr.bf16.mxu0 0
        %1101 = vmatpush1.bf16.msra.mxu0 %v1078
        %1102 = vmatprep.subr.bf16.mxu0 0
        %1103 = vmatpush1.bf16.msra.mxu0 %v1079
        %1104 = vmatprep.subr.bf16.mxu0 0
        %1105 = vmatpush1.bf16.msra.mxu0 0
        %1106 = vmatprep.subr.bf16.mxu0 0
        %1107 = vmatpush1.bf16.msra.mxu0 0
        %1108 = vmatprep.subr.bf16.mxu0 0
        %1109 = vmatpush1.bf16.msra.mxu0 0
        %1110 = vmatprep.subr.bf16.mxu0 0
        %1111 = vmatpush1.bf16.msra.mxu0 0
        %1112 = vmatprep.subr.bf16.mxu0 0
        %1113 = vmatpush1.bf16.msra.mxu0 0
        %1114 = vmatprep.subr.bf16.mxu0 0
        %1115 = vmatpush1.bf16.msra.mxu0 0
        %1116 = vmatprep.subr.bf16.mxu0 0
        %1117 = vmatpush1.bf16.msra.mxu0 0
        %1118 = vmatprep.subr.bf16.mxu0 0
        %1119 = vmatpush1.bf16.msra.mxu0 0
        %1120 = vmatprep.mubr.bf16.mxu0 0
        %1121 = vmatmul.mubr.bf16.gmra.mrb[0].mxu0 %v1009
        %v1122 = vpop.f32.mrb[0].mxu0
        %v1123 = vadd.f32 %v1038, %v1122
        %v1124 = vpop.f32.mrb[0].mxu0
        %v1125 = vpop.f32.mrb[0].mxu0
        %v1126 = vadd.f32 %v1038, %v1125
        %v1127 = vpop.f32.mrb[0].mxu0
        %1128 = vmatprep.mubr.bf16.mxu0 0
        %1129 = vmatmul.mubr.bf16.gmra.mrb[0].mxu0 %v1010
        %v1130 = vpop.f32.mrb[0].mxu0
        %v1131 = vadd.f32 %v1038, %v1130
        %v1132 = vpop.f32.mrb[0].mxu0
        %v1133 = vpop.f32.mrb[0].mxu0
        %v1134 = vadd.f32 %v1038, %v1133
        %v1135 = vpop.f32.mrb[0].mxu0
        %1136 = vmatprep.mubr.bf16.mxu0 0
        %1137 = vmatmul.mubr.bf16.gmra.mrb[0].mxu0 %v1011
        %v1138 = vpop.f32.mrb[0].mxu0
        %v1139 = vadd.f32 %v1038, %v1138
        %v1140 = vpop.f32.mrb[0].mxu0
        %v1141 = vpop.f32.mrb[0].mxu0
        %v1142 = vadd.f32 %v1038, %v1141
        %v1143 = vpop.f32.mrb[0].mxu0
        %1144 = vmatprep.mubr.bf16.mxu0 0
        %1145 = vmatmul.mubr.bf16.gmra.mrb[0].mxu0 %v1012
        %v1146 = vpop.f32.mrb[0].mxu0
        %v1147 = vadd.f32 %v1038, %v1146
        %v1148 = vpop.f32.mrb[0].mxu0
        %v1149 = vpop.f32.mrb[0].mxu0
        %v1150 = vadd.f32 %v1038, %v1149
        %v1151 = vpop.f32.mrb[0].mxu0
        %1152 = vmatprep.mubr.bf16.mxu0 0
        %1153 = vmatmul.mubr.bf16.gmra.mrb[0].mxu0 %v1013
        %v1154 = vpop.f32.mrb[0].mxu0
        %v1155 = vadd.f32 %v1038, %v1154
        %v1156 = vpop.f32.mrb[0].mxu0
        %v1157 = vpop.f32.mrb[0].mxu0
        %v1158 = vadd.f32 %v1038, %v1157
        %v1159 = vpop.f32.mrb[0].mxu0
        %1160 = vmatprep.mubr.bf16.mxu0 0
        %1161 = vmatmul.mubr.bf16.gmra.mrb[0].mxu0 %v1014
        %v1162 = vpop.f32.mrb[0].mxu0
        %v1163 = vadd.f32 %v1038, %v1162
        %v1164 = vpop.f32.mrb[0].mxu0
        %v1165 = vpop.f32.mrb[0].mxu0
        %v1166 = vadd.f32 %v1038, %v1165
        %v1167 = vpop.f32.mrb[0].mxu0
        %1168 = vmatprep.mubr.bf16.mxu0 0
        %1169 = vmatmul.mubr.bf16.gmra.mrb[0].mxu0 %v1015
        %v1170 = vpop.f32.mrb[0].mxu0
        %v1171 = vadd.f32 %v1038, %v1170
        %v1172 = vpop.f32.mrb[0].mxu0
        %v1173 = vpop.f32.mrb[0].mxu0
        %v1174 = vadd.f32 %v1038, %v1173
        %v1175 = vpop.f32.mrb[0].mxu0
        %1176 = vmatprep.mubr.bf16.mxu0 0
        %1177 = vmatmul.mubr.bf16.gmra.mrb[0].mxu0 %v1016
        %v1178 = vpop.f32.mrb[0].mxu0
        %v1179 = vadd.f32 %v1038, %v1178
        %v1180 = vpop.f32.mrb[0].mxu0
        %v1181 = vpop.f32.mrb[0].mxu0
        %v1182 = vadd.f32 %v1038, %v1181
        %v1183 = vpop.f32.mrb[0].mxu0
        %1184 = vdwg.mxu0
        %1185 = vst [vmem:[%s271] sm:$0xff] %v1123
        %1186 = vst [vmem:[%s271 + $0x8] sm:$0xff] %v1126
        %1187 = vst [vmem:[%s271 + $0x10] sm:$0xff] %v1131
        %1188 = vst [vmem:[%s271 + $0x18] sm:$0xff] %v1134
        %1189 = vst [vmem:[%s271 + $0x20] sm:$0xff] %v1139
        %1190 = vst [vmem:[%s271 + $0x28] sm:$0xff] %v1142
        %1191 = vst [vmem:[%s271 + $0x30] sm:$0xff] %v1147
        %1192 = vst [vmem:[%s271 + $0x38] sm:$0xff] %v1150
        %1193 = vst [vmem:[%s271 + $0x40] sm:$0xff] %v1155
        %1194 = vst [vmem:[%s271 + $0x48] sm:$0xff] %v1158
        %1195 = vst [vmem:[%s271 + $0x50] sm:$0xff] %v1163
        %1196 = vst [vmem:[%s271 + $0x58] sm:$0xff] %v1166
        %1197 = vst [vmem:[%s271 + $0x60] sm:$0xff] %v1171
        %1198 = vst [vmem:[%s271 + $0x68] sm:$0xff] %v1174
        %1199 = vst [vmem:[%s271 + $0x70] sm:$0xff] %v1179
        %1200 = vst [vmem:[%s271 + $0x78] sm:$0xff] %v1182
        %s1201 = sand.u32 %s141, 1
        %s1202 = scalar_lea.sflag [#allocation4], %s1201
        %s1203 = sand.u32 %s141, 1
        %s1204 = smul.addr %s1203, 128
        %s1205 = scalar_lea.vmem [#allocation8], %s1204
        // Predicated region
        $region53: #{tpu_custom_call.1} parent=39 // pred_check
          %p1206 = pneg %p151
        $region54: #{tpu_custom_call.1} parent=39 // pred_check_branch
          %1208 = sbr.rel (%p1206) target = $region56
        $region55: #{tpu_custom_call.1} parent=39 // pred_region
          %s1209 = smul.u32 16, %s23
          %s1211 = ssub.s32 2048, 2048
          %1212 = vsyncadd %s1202, %s1211
          %s1213 = smul.addr %s1209, 128
          %s1214 = scalar_lea.hbm %s5, %s1213
          %s1215 = sshll.u32 %s1205, 4
          %s1216 = int_to_ptr.vmem [resolvable:$true] %s1215
          %1221 = dma.vmem_to_hbm [thread:$0]  %s1216, 2048, %s1214, %s1202, 128, 128, 8
        $region56: #{tpu_custom_call.1} parent=39 // pred_fallthru
          _
      $region40: #{tpu_custom_call.1} parent=5 // pred_fallthru
        _
      %p1222 = scmp.le.s32.totalorder 2, %s18
      // Predicated region
      $region57: #{tpu_custom_call.1} parent=5 // pred_check
        %p1223 = pneg %p1222
      $region58: #{tpu_custom_call.1} parent=5 // pred_check_branch
        %1225 = sbr.rel (%p1223) target = $region60
      $region59: #{tpu_custom_call.1} parent=5 // pred_region
        %s1226 = ssub.s32 %s18, 2
        // Predicated region
        $region61: #{tpu_custom_call.1} parent=59 // pred_check
          %p1227 = pneg %p157
        $region62: #{tpu_custom_call.1} parent=59 // pred_check_branch
          %1229 = sbr.rel (%p1227) target = $region64
        $region63: #{tpu_custom_call.1} parent=59 // pred_region
          %s1230 = sand.u32 %s142, 1
          %s1231 = scalar_lea.sflag [#allocation4], %s1230
          %s1232 = sand.u32 %s142, 1
          %s1233 = smul.addr %s1232, 128
          %s1234 = scalar_lea.vmem [#allocation8], %s1233
          %1235 = dma.done %s1231, 2048
        $region64: #{tpu_custom_call.1} parent=59 // pred_fallthru
          _
      $region60: #{tpu_custom_call.1} parent=5 // pred_fallthru
        _
    $region6: #{tpu_custom_call.1} parent=1 // loop_footer
      %s22 = sadd.s32 1, %s18
    $region7: #{tpu_custom_call.1} parent=1 // loop_footer_branch
      %17 = sbr.rel target = $region3
    $region8: #{tpu_custom_call.1} parent=1 // loop_exit
      _
    %1236 = vsyncpa [#allocation3], 1
    %s1237 = scalar_lea.sflag [#allocation3], 1
    %1238 = vsyncpa %s1237, 1
    %1239 = vsyncpa [#allocation6], 1
    %1240 = vsyncpa [#allocation4], 1
    %s1241 = scalar_lea.sflag [#allocation4], 1
    %1242 = vsyncpa %s1241, 1

// kernel: tpu_custom_call.1
$region0: #{tpu_custom_call.1}
  #allocation0 [shape = 'u32[]', space=smem, size = 0x4, offset = 0x4, fixed_abs, tag = 'smem constant byte address 0x4 - core index']
  #allocation1 [shape = 'u32[144,128]{1,0:T(1,128)}', space=vmem, size = 0x12000, scoped, tag = 'internal scratch']
  %s0 = inlined_call_operand.hbm [shape: bf16[4,10,16,96], index: 0, kind: input, shape index: {}]
  %s1 = inlined_call_operand.hbm [shape: bf16[3,96,128], index: 1, kind: input, shape index: {}]
  %s2 = inlined_call_operand.vmem [shape: f32[1,128], index: 2, kind: input, shape index: {}]
  %s3 = inlined_call_operand.hbm [shape: bf16[128,128], index: 3, kind: input, shape index: {}]
  %s4 = inlined_call_operand.vmem [shape: f32[1,128], index: 4, kind: input, shape index: {}]
  %s5 = inlined_call_operand.hbm [shape: f32[512,128], index: 5, kind: output, shape index: {}]
  %s6 = sld [smem:[#allocation0]]
  $region65: #{tpu_custom_call.1} parent=0
    _
  %s8 = ssub.s32 1, %s6
  %s9 = scalar_select 0, %s8, %s6
  $region1: #{tpu_custom_call.1} parent=0
    #allocation2 [shape = 'u8[81920]{0}', space=vmem, size = 0x14000, scoped, tag = 'input window, operand 0']
    #allocation3 [shape = 's32[2]{0}', space=sflag, size = 0x8, scoped, tag = 'scoped memory for tpu_custom_call.1']
    #allocation4 [shape = 's32[2]{0}', space=sflag, size = 0x8, scoped, tag = 'scoped memory for tpu_custom_call.1']
    #allocation5 [shape = 'u8[73728]{0}', space=vmem, size = 0x12000, scoped, tag = 'input window, operand 1, single buffered']
    #allocation6 [shape = 's32[1]{0}', space=sflag, size = 0x4, scoped, tag = 'scoped memory for tpu_custom_call.1']
    #allocation7 [shape = 'u8[32768]{0}', space=vmem, size = 0x8000, scoped, tag = 'input window, operand 3, single buffered']
    #allocation8 [shape = 'u8[131072]{0}', space=vmem, size = 0x20000, scoped, tag = 'output window, operand 0']
    %10 = vsyncpa [#allocation3], 0
    %s11 = scalar_lea.sflag [#allocation3], 1
    %12 = vsyncpa %s11, 0
    %13 = vsyncpa [#allocation6], 0
    %14 = vsyncpa [#allocation4], 0
    %s15 = scalar_lea.sflag [#allocation4], 1
    %16 = vsyncpa %s15, 0
    loop: start=0, step=1, limit=6
    $region2: #{tpu_custom_call.1} parent=1 // loop_pre_header
      _
    $region3: #{tpu_custom_call.1} parent=1 // loop_header
      %s18 = sphi 0, %s22
      %p19 = scmp.ge.s32.totalorder %s18, 6
      %s28 = sphi 0, %s30
      %s31 = sphi 0, %s28
      %s32 = sphi 0, %s31
      %s48 = sphi 0, %s32
      %s52 = sphi 0, %s52
      %s54 = sphi 0, %s52
      %s55 = sphi 0, %s54
      %s69 = sphi 0, %s55
      %s73 = sphi 0, %s73
      %s75 = sphi 0, %s73
      %s76 = sphi 0, %s75
      %s90 = sphi 0, %s76
      %s94 = sphi 0, %s94
      %s96 = sphi 0, %s94
      %s97 = sphi 0, %s96
      %s111 = sphi 0, %s97
      %s115 = sphi 0, %s115
      %s117 = sphi 0, %s115
      %s118 = sphi 0, %s117
      %s132 = sphi 0, %s118
      %s138 = sphi 0, %s140
      %s141 = sphi 0, %s138
      %s142 = sphi 0, %s141
      %s158 = sphi 0, %s142
    $region4: #{tpu_custom_call.1} parent=1 // loop_header_branch
      %21 = sbr.rel (%p19) target = $region8
    $region5: #{tpu_custom_call.1} parent=1 // loop_body
      %s23 = ssub.s32 %s18, 1
      %s24 = ssub.s32 %s18, 2
      %s25 = sadd.s32 %s18, 1
      %s26 = ssub.s32 %s18, %s25
      %p27 = scmp.eq.s32.totalorder %s26, 0
      %s29 = sadd.s32 %s28, 1
      %s30 = scalar_select %p27, %s28, %s29
      %p33 = pneg %p27
      %p34 = scmp.eq.s32.totalorder %s18, 3
      %p35 = por %p33, %p34
      %p36 = scmp.ne.s32.totalorder %s28, %s31
      %p37 = scmp.eq.s32.totalorder %s18, 0
      %p38 = por %p36, %p37
      %p39 = scmp.ne.s32.totalorder %s28, %s31
      %p40 = scmp.eq.s32.totalorder %s23, 3
      %p41 = por %p39, %p40
      %p42 = scmp.ne.s32.totalorder %s31, %s32
      %p43 = scmp.eq.s32.totalorder %s23, 0
      %p44 = por %p42, %p43
      %p45 = scmp.ne.s32.totalorder %s31, %s32
      %p46 = scmp.eq.s32.totalorder %s24, 3
      %p47 = por %p45, %p46
      %p49 = scmp.ne.s32.totalorder %s32, %s48
      %p50 = scmp.eq.s32.totalorder %s24, 0
      %p51 = por %p49, %p50
      %s53 = sadd.s32 %s52, 1
      %p56 = scmp.eq.s32.totalorder %s18, 3
      %p57 = scmp.ne.s32.totalorder %s52, %s54
      %p58 = scmp.eq.s32.totalorder %s18, 0
      %p59 = por %p57, %p58
      %p60 = scmp.ne.s32.totalorder %s52, %s54
      %p61 = scmp.eq.s32.totalorder %s23, 3
      %p62 = por %p60, %p61
      %p63 = scmp.ne.s32.totalorder %s54, %s55
      %p64 = scmp.eq.s32.totalorder %s23, 0
      %p65 = por %p63, %p64
      %p66 = scmp.ne.s32.totalorder %s54, %s55
      %p67 = scmp.eq.s32.totalorder %s24, 3
      %p68 = por %p66, %p67
      %p70 = scmp.ne.s32.totalorder %s55, %s69
      %p71 = scmp.eq.s32.totalorder %s24, 0
      %p72 = por %p70, %p71
      %s74 = sadd.s32 %s73, 1
      %p77 = scmp.eq.s32.totalorder %s18, 3
      %p78 = scmp.ne.s32.totalorder %s73, %s75
      %p79 = scmp.eq.s32.totalorder %s18, 0
      %p80 = por %p78, %p79
      %p81 = scmp.ne.s32.totalorder %s73, %s75
      %p82 = scmp.eq.s32.totalorder %s23, 3
      %p83 = por %p81, %p82
      %p84 = scmp.ne.s32.totalorder %s75, %s76
      %p85 = scmp.eq.s32.totalorder %s23, 0
      %p86 = por %p84, %p85
      %p87 = scmp.ne.s32.totalorder %s75, %s76
      %p88 = scmp.eq.s32.totalorder %s24, 3
      %p89 = por %p87, %p88
      %p91 = scmp.ne.s32.totalorder %s76, %s90
      %p92 = scmp.eq.s32.totalorder %s24, 0
      %p93 = por %p91, %p92
      %s95 = sadd.s32 %s94, 1
      %p98 = scmp.eq.s32.totalorder %s18, 3
      %p99 = scmp.ne.s32.totalorder %s94, %s96
      %p100 = scmp.eq.s32.totalorder %s18, 0
      %p101 = por %p99, %p100
      %p102 = scmp.ne.s32.totalorder %s94, %s96
      %p103 = scmp.eq.s32.totalorder %s23, 3
      %p104 = por %p102, %p103
      %p105 = scmp.ne.s32.totalorder %s96, %s97
      %p106 = scmp.eq.s32.totalorder %s23, 0
      %p107 = por %p105, %p106
      %p108 = scmp.ne.s32.totalorder %s96, %s97
      %p109 = scmp.eq.s32.totalorder %s24, 3
      %p110 = por %p108, %p109
      %p112 = scmp.ne.s32.totalorder %s97, %s111
      %p113 = scmp.eq.s32.totalorder %s24, 0
      %p114 = por %p112, %p113
      %s116 = sadd.s32 %s115, 1
      %p119 = scmp.eq.s32.totalorder %s18, 3
      %p120 = scmp.ne.s32.totalorder %s115, %s117
      %p121 = scmp.eq.s32.totalorder %s18, 0
      %p122 = por %p120, %p121
      %p123 = scmp.ne.s32.totalorder %s115, %s117
      %p124 = scmp.eq.s32.totalorder %s23, 3
      %p125 = por %p123, %p124
      %p126 = scmp.ne.s32.totalorder %s117, %s118
      %p127 = scmp.eq.s32.totalorder %s23, 0
      %p128 = por %p126, %p127
      %p129 = scmp.ne.s32.totalorder %s117, %s118
      %p130 = scmp.eq.s32.totalorder %s24, 3
      %p131 = por %p129, %p130
      %p133 = scmp.ne.s32.totalorder %s118, %s132
      %p134 = scmp.eq.s32.totalorder %s24, 0
      %p135 = por %p133, %p134
      %s136 = ssub.s32 %s18, %s25
      %p137 = scmp.eq.s32.totalorder %s136, 0
      %s139 = sadd.s32 %s138, 1
      %s140 = scalar_select %p137, %s138, %s139
      %p143 = pneg %p137
      %p144 = scmp.eq.s32.totalorder %s18, 3
      %p145 = por %p143, %p144
      %p146 = scmp.ne.s32.totalorder %s138, %s141
      %p147 = scmp.eq.s32.totalorder %s18, 0
      %p148 = por %p146, %p147
      %p149 = scmp.ne.s32.totalorder %s138, %s141
      %p150 = scmp.eq.s32.totalorder %s23, 3
      %p151 = por %p149, %p150
      %p152 = scmp.ne.s32.totalorder %s141, %s142
      %p153 = scmp.eq.s32.totalorder %s23, 0
      %p154 = por %p152, %p153
      %p155 = scmp.ne.s32.totalorder %s141, %s142
      %p156 = scmp.eq.s32.totalorder %s24, 3
      %p157 = por %p155, %p156
      %p159 = scmp.ne.s32.totalorder %s142, %s158
      %p160 = scmp.eq.s32.totalorder %s24, 0
      %p161 = por %p159, %p160
      %p162 = scmp.le.s32.totalorder 1, %s18
      %p163 = scmp.lt.s32.totalorder %s18, 5
      %p164 = pnand %p162, %p163
      %p165 = pneg %p164
      // Predicated region
      $region9: #{tpu_custom_call.1} parent=5 // pred_check
        _
      $region10: #{tpu_custom_call.1} parent=5 // pred_check_branch
        %167 = sbr.rel (%p164) target = $region12
      $region11: #{tpu_custom_call.1} parent=5 // pred_region
        %s168 = ssub.s32 %s18, 1
        // Predicated region
        $region13: #{tpu_custom_call.1} parent=11 // pred_check
          %p169 = pneg %p65
        $region14: #{tpu_custom_call.1} parent=11 // pred_check_branch
          %171 = sbr.rel (%p169) target = $region16
        $region15: #{tpu_custom_call.1} parent=11 // pred_region
          %s173 = ssub.s32 2304, 2304
          %174 = vsyncadd [#allocation6], %s173
          %s175 = sshll.u32 [#allocation5], 4
          %s176 = int_to_ptr.vmem [resolvable:$true] %s175
          %181 = dma.hbm_to_vmem [thread:$0]  %s1, 2304, %s176, [#allocation6], 64, 64, 4
        $region16: #{tpu_custom_call.1} parent=11 // pred_fallthru
          _
        // Predicated region
        $region17: #{tpu_custom_call.1} parent=11 // pred_check
          %p182 = pneg %p86
        $region18: #{tpu_custom_call.1} parent=11 // pred_check_branch
          %184 = sbr.rel (%p182) target = $region20
        $region19: #{tpu_custom_call.1} parent=11 // pred_region
          _
        $region20: #{tpu_custom_call.1} parent=11 // pred_fallthru
          _
        // Predicated region
        $region21: #{tpu_custom_call.1} parent=11 // pred_check
          %p185 = pneg %p107
        $region22: #{tpu_custom_call.1} parent=11 // pred_check_branch
          %187 = sbr.rel (%p185) target = $region24
        $region23: #{tpu_custom_call.1} parent=11 // pred_region
          %s189 = ssub.s32 1024, 1024
          %190 = vsyncadd [#allocation6], %s189
          %s191 = sshll.u32 [#allocation7], 4
          %s192 = int_to_ptr.vmem [resolvable:$true] %s191
          %197 = dma.hbm_to_vmem [thread:$0]  %s3, 1024, %s192, [#allocation6], 64, 64, 4
        $region24: #{tpu_custom_call.1} parent=11 // pred_fallthru
          _
        // Predicated region
        $region25: #{tpu_custom_call.1} parent=11 // pred_check
          %p198 = pneg %p128
        $region26: #{tpu_custom_call.1} parent=11 // pred_check_branch
          %200 = sbr.rel (%p198) target = $region28
        $region27: #{tpu_custom_call.1} parent=11 // pred_region
          _
        $region28: #{tpu_custom_call.1} parent=11 // pred_fallthru
          _
      $region12: #{tpu_custom_call.1} parent=5 // pred_fallthru
        _
      %p201 = scmp.lt.s32.totalorder %s18, 4
      // Predicated region
      $region29: #{tpu_custom_call.1} parent=5 // pred_check
        %p202 = pneg %p201
      $region30: #{tpu_custom_call.1} parent=5 // pred_check_branch
        %204 = sbr.rel (%p202) target = $region32
      $region31: #{tpu_custom_call.1} parent=5 // pred_region
        // Predicated region
        $region33: #{tpu_custom_call.1} parent=31 // pred_check
          %p205 = pneg %p38
        $region34: #{tpu_custom_call.1} parent=31 // pred_check_branch
          %207 = sbr.rel (%p205) target = $region36
        $region35: #{tpu_custom_call.1} parent=31 // pred_region
          %s208 = sand.u32 %s28, 1
          %s209 = scalar_lea.sflag [#allocation3], %s208
          %s210 = sand.u32 %s28, 1
          %s211 = smul.addr %s210, 80
          %s212 = scalar_lea.vmem [#allocation2], %s211
          %s214 = ssub.s32 1280, 1280
          %215 = vsyncadd %s209, %s214
          %s216 = smul.addr %s18, 20
          %s217 = smul.addr %s216, 64
          %s218 = scalar_lea.hbm %s0, %s217
          %s219 = sshll.u32 %s212, 4
          %s220 = int_to_ptr.vmem [resolvable:$true] %s219
          %225 = dma.hbm_to_vmem [thread:$0]  %s218, 1280, %s220, %s209, 64, 64, 4
        $region36: #{tpu_custom_call.1} parent=31 // pred_fallthru
          _
      $region32: #{tpu_custom_call.1} parent=5 // pred_fallthru
        _
      %p226 = scmp.le.s32.totalorder 1, %s18
      %p227 = scmp.lt.s32.totalorder %s18, 5
      %p228 = pnand %p226, %p227
      %p229 = pneg %p228
      // Predicated region
      $region37: #{tpu_custom_call.1} parent=5 // pred_check
        _
      $region38: #{tpu_custom_call.1} parent=5 // pred_check_branch
        %231 = sbr.rel (%p228) target = $region40
      $region39: #{tpu_custom_call.1} parent=5 // pred_region
        %s232 = ssub.s32 %s18, 1
        %s233 = sand.u32 %s31, 1
        %s234 = scalar_lea.sflag [#allocation3], %s233
        %s235 = sand.u32 %s31, 1
        %s236 = smul.addr %s235, 80
        %s237 = scalar_lea.vmem [#allocation2], %s236
        // Predicated region
        $region41: #{tpu_custom_call.1} parent=39 // pred_check
          %p238 = pneg %p44
        $region42: #{tpu_custom_call.1} parent=39 // pred_check_branch
          %240 = sbr.rel (%p238) target = $region44
        $region43: #{tpu_custom_call.1} parent=39 // pred_region
          %241 = dma.done %s234, 1280
        $region44: #{tpu_custom_call.1} parent=39 // pred_fallthru
          _
        // Predicated region
        $region45: #{tpu_custom_call.1} parent=39 // pred_check
          %p242 = pneg %p65
        $region46: #{tpu_custom_call.1} parent=39 // pred_check_branch
          %244 = sbr.rel (%p242) target = $region48
        $region47: #{tpu_custom_call.1} parent=39 // pred_region
          %245 = dma.done [#allocation6], 2304
        $region48: #{tpu_custom_call.1} parent=39 // pred_fallthru
          _
        // Predicated region
        $region49: #{tpu_custom_call.1} parent=39 // pred_check
          %p246 = pneg %p107
        $region50: #{tpu_custom_call.1} parent=39 // pred_check_branch
          %248 = sbr.rel (%p246) target = $region52
        $region51: #{tpu_custom_call.1} parent=39 // pred_region
          %249 = dma.done [#allocation6], 1024
        $region52: #{tpu_custom_call.1} parent=39 // pred_fallthru
          _
        %s250 = sand.u32 %s31, 1
        %s251 = scalar_lea.sflag [#allocation3], %s250
        %s252 = sand.u32 %s31, 1
        %s253 = smul.addr %s252, 80
        %s254 = scalar_lea.vmem [#allocation2], %s253
        %p255 = pneg %p44
        %p256 = pneg %p41
        %p257 = pneg %p65
        %p258 = pneg %p62
        %p259 = pneg %p86
        %p260 = pneg %p83
        %p261 = pneg %p107
        %p262 = pneg %p104
        %p263 = pneg %p128
        %p264 = pneg %p125
        %p265 = pneg %p154
        %p266 = pneg %p151
        %s267 = sand.u32 %s141, 1
        %s268 = scalar_lea.sflag [#allocation4], %s267
        %s269 = sand.u32 %s141, 1
        %s270 = smul.addr %s269, 128
        %s271 = scalar_lea.vmem [#allocation8], %s270
        %s272 = smul.u32 16, %s23
        %v274 = vld [vmem:[%s237] sm:$0xf]
        %v275 = vld [vmem:[%s237 + $0x4] sm:$0xf]
        %v276 = vld [vmem:[%s237 + $0x8] sm:$0xf]
        %v277 = vld [vmem:[%s237 + $0xc] sm:$0xf]
        %v278 = vld [vmem:[%s237 + $0x10] sm:$0xf]
        %v279 = vld [vmem:[%s237 + $0x14] sm:$0xf]
        %v280 = vld [vmem:[%s237 + $0x18] sm:$0xf]
        %v281 = vld [vmem:[%s237 + $0x1c] sm:$0xf]
        %v282 = vld [vmem:[%s237 + $0x20] sm:$0xf]
        %v283 = vld [vmem:[%s237 + $0x24] sm:$0xf]
        %v284 = vld [vmem:[%s237 + $0x28] sm:$0xf]
        %v285 = vld [vmem:[%s237 + $0x2c] sm:$0xf]
        %v286 = vld [vmem:[%s237 + $0x30] sm:$0xf]
        %v287 = vld [vmem:[%s237 + $0x34] sm:$0xf]
        %v288 = vld [vmem:[%s237 + $0x38] sm:$0xf]
        %v289 = vld [vmem:[%s237 + $0x3c] sm:$0xf]
        %v290 = vld [vmem:[#allocation5] sm:$0xf]
        %v291 = vld [vmem:[#allocation5 + $0x4] sm:$0xf]
        %v292 = vld [vmem:[#allocation5 + $0x8] sm:$0xf]
        %v293 = vld [vmem:[#allocation5 + $0xc] sm:$0xf]
        %v294 = vld [vmem:[#allocation5 + $0x10] sm:$0xf]
        %v295 = vld [vmem:[#allocation5 + $0x14] sm:$0xf]
        %v296 = vld [vmem:[#allocation5 + $0x18] sm:$0xf]
        %v297 = vld [vmem:[#allocation5 + $0x1c] sm:$0xf]
        %v298 = vld [vmem:[#allocation5 + $0x20] sm:$0xf]
        %v299 = vld [vmem:[#allocation5 + $0x24] sm:$0xf]
        %v300 = vld [vmem:[#allocation5 + $0x28] sm:$0xf]
        %v301 = vld [vmem:[#allocation5 + $0x2c] sm:$0xf]
        %s302 = scalar_lea.vmem %s237, 8 [#allocation2]
        %v303 = vld [vmem:[%s302] sm:$0xf]
        %v304 = vld [vmem:[%s302 + $0x4] sm:$0xf]
        %v305 = vld [vmem:[%s302 + $0x8] sm:$0xf]
        %v306 = vld [vmem:[%s302 + $0xc] sm:$0xf]
        %v307 = vld [vmem:[%s302 + $0x10] sm:$0xf]
        %v308 = vld [vmem:[%s302 + $0x14] sm:$0xf]
        %v309 = vld [vmem:[%s302 + $0x18] sm:$0xf]
        %v310 = vld [vmem:[%s302 + $0x1c] sm:$0xf]
        %v311 = vld [vmem:[%s302 + $0x20] sm:$0xf]
        %v312 = vld [vmem:[%s302 + $0x24] sm:$0xf]
        %v313 = vld [vmem:[%s302 + $0x28] sm:$0xf]
        %v314 = vld [vmem:[%s302 + $0x2c] sm:$0xf]
        %v315 = vld [vmem:[%s302 + $0x30] sm:$0xf]
        %v316 = vld [vmem:[%s302 + $0x34] sm:$0xf]
        %v317 = vld [vmem:[%s302 + $0x38] sm:$0xf]
        %v318 = vld [vmem:[%s302 + $0x3c] sm:$0xf]
        %s319 = scalar_lea.vmem [#allocation5], 48
        %v320 = vld [vmem:[%s319] sm:$0xf]
        %v321 = vld [vmem:[%s319 + $0x4] sm:$0xf]
        %v322 = vld [vmem:[%s319 + $0x8] sm:$0xf]
        %v323 = vld [vmem:[%s319 + $0xc] sm:$0xf]
        %v324 = vld [vmem:[%s319 + $0x10] sm:$0xf]
        %v325 = vld [vmem:[%s319 + $0x14] sm:$0xf]
        %v326 = vld [vmem:[%s319 + $0x18] sm:$0xf]
        %v327 = vld [vmem:[%s319 + $0x1c] sm:$0xf]
        %v328 = vld [vmem:[%s319 + $0x20] sm:$0xf]
        %v329 = vld [vmem:[%s319 + $0x24] sm:$0xf]
        %v330 = vld [vmem:[%s319 + $0x28] sm:$0xf]
        %v331 = vld [vmem:[%s319 + $0x2c] sm:$0xf]
        %v348 = vunpack.c.l.b16 %v303
        %v349 = vunpack.c.l.b16 %v304
        %v350 = vunpack.c.l.b16 %v305
        %v351 = vunpack.c.l.b16 %v306
        %v352 = vunpack.c.l.b16 %v307
        %v353 = vunpack.c.l.b16 %v308
        %v354 = vunpack.c.l.b16 %v309
        %v355 = vunpack.c.l.b16 %v310
        %v356 = vunpack.c.l.b16 %v311
        %v357 = vunpack.c.l.b16 %v312
        %v358 = vunpack.c.l.b16 %v313
        %v359 = vunpack.c.l.b16 %v314
        %v360 = vunpack.c.l.b16 %v315
        %v361 = vunpack.c.l.b16 %v316
        %v362 = vunpack.c.l.b16 %v317
        %v363 = vunpack.c.l.b16 %v318
        %v364 = vpack.c.b16 %v349, %v348
        %v365 = vpack.c.b16 %v351, %v350
        %v366 = vpack.c.b16 %v353, %v352
        %v367 = vpack.c.b16 %v355, %v354
        %v368 = vpack.c.b16 %v357, %v356
        %v369 = vpack.c.b16 %v359, %v358
        %v370 = vpack.c.b16 %v361, %v360
        %v371 = vpack.c.b16 %v363, %v362
        %v384 = vunpack.c.l.b16 %v320
        %v385 = vunpack.c.l.b16 %v321
        %v386 = vunpack.c.l.b16 %v322
        %v387 = vunpack.c.l.b16 %v323
        %v388 = vunpack.c.l.b16 %v324
        %v389 = vunpack.c.l.b16 %v325
        %v390 = vunpack.c.l.b16 %v326
        %v391 = vunpack.c.l.b16 %v327
        %v392 = vunpack.c.l.b16 %v328
        %v393 = vunpack.c.l.b16 %v329
        %v394 = vunpack.c.l.b16 %v330
        %v395 = vunpack.c.l.b16 %v331
        %v396 = vpack.c.b16 %v385, %v384
        %v397 = vpack.c.b16 %v387, %v386
        %v398 = vpack.c.b16 %v389, %v388
        %v399 = vpack.c.b16 %v391, %v390
        %v400 = vpack.c.b16 %v393, %v392
        %v401 = vpack.c.b16 %v395, %v394
        %vm408 = vcmask 785408
        %v410 = vsel %vm408, %v364, 0
        %v413 = vsel %vm408, %v365, 0
        %v416 = vsel %vm408, %v366, 0
        %v419 = vsel %vm408, %v367, 0
        %v422 = vsel %vm408, %v368, 0
        %v425 = vsel %vm408, %v369, 0
        %v428 = vsel %vm408, %v370, 0
        %v431 = vsel %vm408, %v371, 0
        %433 = vmatprep.subr.bf16.mxu0 0
        %434 = vmatpush1.bf16.msra.mxu0 %v396
        %435 = vmatprep.subr.bf16.mxu0 0
        %436 = vmatpush1.bf16.msra.mxu0 %v397
        %437 = vmatprep.subr.bf16.mxu0 0
        %438 = vmatpush1.bf16.msra.mxu0 %v398
        %439 = vmatprep.subr.bf16.mxu0 0
        %440 = vmatpush1.bf16.msra.mxu0 %v399
        %441 = vmatprep.subr.bf16.mxu0 0
        %442 = vmatpush1.bf16.msra.mxu0 %v400
        %443 = vmatprep.subr.bf16.mxu0 0
        %444 = vmatpush1.bf16.msra.mxu0 %v401
        %445 = vmatprep.subr.bf16.mxu0 0
        %446 = vmatpush1.bf16.msra.mxu0 0
        %447 = vmatprep.subr.bf16.mxu0 0
        %448 = vmatpush1.bf16.msra.mxu0 0
        %449 = vmatprep.subr.bf16.mxu0 0
        %450 = vmatpush1.bf16.msra.mxu0 0
        %451 = vmatprep.subr.bf16.mxu0 0
        %452 = vmatpush1.bf16.msra.mxu0 0
        %453 = vmatprep.subr.bf16.mxu0 0
        %454 = vmatpush1.bf16.msra.mxu0 0
        %455 = vmatprep.subr.bf16.mxu0 0
        %456 = vmatpush1.bf16.msra.mxu0 0
        %457 = vmatprep.subr.bf16.mxu0 0
        %458 = vmatpush1.bf16.msra.mxu0 0
        %459 = vmatprep.subr.bf16.mxu0 0
        %460 = vmatpush1.bf16.msra.mxu0 0
        %461 = vmatprep.subr.bf16.mxu0 0
        %462 = vmatpush1.bf16.msra.mxu0 0
        %463 = vmatprep.subr.bf16.mxu0 0
        %464 = vmatpush1.bf16.msra.mxu0 0
        %465 = vmatprep.mubr.bf16.mxu0 0
        %466 = vmatmul.mubr.bf16.gmra.mrb[0].mxu0 %v410
        %v467 = vpop.f32.mrb[0].mxu0
        %v468 = vadd.f32 0.0, %v467
        %v469 = vpop.f32.mrb[0].mxu0
        %v470 = vpop.f32.mrb[0].mxu0
        %v471 = vadd.f32 0.0, %v470
        %v472 = vpop.f32.mrb[0].mxu0
        %473 = vmatprep.mubr.bf16.mxu0 0
        %474 = vmatmul.mubr.bf16.gmra.mrb[0].mxu0 %v413
        %v475 = vpop.f32.mrb[0].mxu0
        %v476 = vadd.f32 0.0, %v475
        %v477 = vpop.f32.mrb[0].mxu0
        %v478 = vpop.f32.mrb[0].mxu0
        %v479 = vadd.f32 0.0, %v478
        %v480 = vpop.f32.mrb[0].mxu0
        %481 = vmatprep.mubr.bf16.mxu0 0
        %482 = vmatmul.mubr.bf16.gmra.mrb[0].mxu0 %v416
        %v483 = vpop.f32.mrb[0].mxu0
        %v484 = vadd.f32 0.0, %v483
        %v485 = vpop.f32.mrb[0].mxu0
        %v486 = vpop.f32.mrb[0].mxu0
        %v487 = vadd.f32 0.0, %v486
        %v488 = vpop.f32.mrb[0].mxu0
        %489 = vmatprep.mubr.bf16.mxu0 0
        %490 = vmatmul.mubr.bf16.gmra.mrb[0].mxu0 %v419
        %v491 = vpop.f32.mrb[0].mxu0
        %v492 = vadd.f32 0.0, %v491
        %v493 = vpop.f32.mrb[0].mxu0
        %v494 = vpop.f32.mrb[0].mxu0
        %v495 = vadd.f32 0.0, %v494
        %v496 = vpop.f32.mrb[0].mxu0
        %497 = vmatprep.mubr.bf16.mxu0 0
        %498 = vmatmul.mubr.bf16.gmra.mrb[0].mxu0 %v422
        %v499 = vpop.f32.mrb[0].mxu0
        %v500 = vadd.f32 0.0, %v499
        %v501 = vpop.f32.mrb[0].mxu0
        %v502 = vpop.f32.mrb[0].mxu0
        %v503 = vadd.f32 0.0, %v502
        %v504 = vpop.f32.mrb[0].mxu0
        %505 = vmatprep.mubr.bf16.mxu0 0
        %506 = vmatmul.mubr.bf16.gmra.mrb[0].mxu0 %v425
        %v507 = vpop.f32.mrb[0].mxu0
        %v508 = vadd.f32 0.0, %v507
        %v509 = vpop.f32.mrb[0].mxu0
        %v510 = vpop.f32.mrb[0].mxu0
        %v511 = vadd.f32 0.0, %v510
        %v512 = vpop.f32.mrb[0].mxu0
        %513 = vmatprep.mubr.bf16.mxu0 0
        %514 = vmatmul.mubr.bf16.gmra.mrb[0].mxu0 %v428
        %v515 = vpop.f32.mrb[0].mxu0
        %v516 = vadd.f32 0.0, %v515
        %v517 = vpop.f32.mrb[0].mxu0
        %v518 = vpop.f32.mrb[0].mxu0
        %v519 = vadd.f32 0.0, %v518
        %v520 = vpop.f32.mrb[0].mxu0
        %521 = vmatprep.mubr.bf16.mxu0 0
        %522 = vmatmul.mubr.bf16.gmra.mrb[0].mxu0 %v431
        %v523 = vpop.f32.mrb[0].mxu0
        %v524 = vadd.f32 0.0, %v523
        %v525 = vpop.f32.mrb[0].mxu0
        %v526 = vpop.f32.mrb[0].mxu0
        %v527 = vadd.f32 0.0, %v526
        %v528 = vpop.f32.mrb[0].mxu0
        %529 = vdwg.mxu0
        %v546 = vunpack.c.l.b16 %v274
        %v547 = vunpack.c.l.b16 %v275
        %v548 = vunpack.c.l.b16 %v276
        %v549 = vunpack.c.l.b16 %v277
        %v550 = vunpack.c.l.b16 %v278
        %v551 = vunpack.c.l.b16 %v279
        %v552 = vunpack.c.l.b16 %v280
        %v553 = vunpack.c.l.b16 %v281
        %v554 = vunpack.c.l.b16 %v282
        %v555 = vunpack.c.l.b16 %v283
        %v556 = vunpack.c.l.b16 %v284
        %v557 = vunpack.c.l.b16 %v285
        %v558 = vunpack.c.l.b16 %v286
        %v559 = vunpack.c.l.b16 %v287
        %v560 = vunpack.c.l.b16 %v288
        %v561 = vunpack.c.l.b16 %v289
        %v562 = vpack.c.b16 %v547, %v546
        %v563 = vpack.c.b16 %v549, %v548
        %v564 = vpack.c.b16 %v551, %v550
        %v565 = vpack.c.b16 %v553, %v552
        %v566 = vpack.c.b16 %v555, %v554
        %v567 = vpack.c.b16 %v557, %v556
        %v568 = vpack.c.b16 %v559, %v558
        %v569 = vpack.c.b16 %v561, %v560
        %v582 = vunpack.c.l.b16 %v290
        %v583 = vunpack.c.l.b16 %v291
        %v584 = vunpack.c.l.b16 %v292
        %v585 = vunpack.c.l.b16 %v293
        %v586 = vunpack.c.l.b16 %v294
        %v587 = vunpack.c.l.b16 %v295
        %v588 = vunpack.c.l.b16 %v296
        %v589 = vunpack.c.l.b16 %v297
        %v590 = vunpack.c.l.b16 %v298
        %v591 = vunpack.c.l.b16 %v299
        %v592 = vunpack.c.l.b16 %v300
        %v593 = vunpack.c.l.b16 %v301
        %v594 = vpack.c.b16 %v583, %v582
        %v595 = vpack.c.b16 %v585, %v584
        %v596 = vpack.c.b16 %v587, %v586
        %v597 = vpack.c.b16 %v589, %v588
        %v598 = vpack.c.b16 %v591, %v590
        %v599 = vpack.c.b16 %v593, %v592
        %v607 = vsel %vm408, %v562, 0
        %v610 = vsel %vm408, %v563, 0
        %v613 = vsel %vm408, %v564, 0
        %v616 = vsel %vm408, %v565, 0
        %v619 = vsel %vm408, %v566, 0
        %v622 = vsel %vm408, %v567, 0
        %v625 = vsel %vm408, %v568, 0
        %v628 = vsel %vm408, %v569, 0
        %630 = vmatprep.subr.bf16.mxu0 0
        %631 = vmatpush1.bf16.msra.mxu0 %v594
        %632 = vmatprep.subr.bf16.mxu0 0
        %633 = vmatpush1.bf16.msra.mxu0 %v595
        %634 = vmatprep.subr.bf16.mxu0 0
        %635 = vmatpush1.bf16.msra.mxu0 %v596
        %636 = vmatprep.subr.bf16.mxu0 0
        %637 = vmatpush1.bf16.msra.mxu0 %v597
        %638 = vmatprep.subr.bf16.mxu0 0
        %639 = vmatpush1.bf16.msra.mxu0 %v598
        %640 = vmatprep.subr.bf16.mxu0 0
        %641 = vmatpush1.bf16.msra.mxu0 %v599
        %642 = vmatprep.subr.bf16.mxu0 0
        %643 = vmatpush1.bf16.msra.mxu0 0
        %644 = vmatprep.subr.bf16.mxu0 0
        %645 = vmatpush1.bf16.msra.mxu0 0
        %646 = vmatprep.subr.bf16.mxu0 0
        %647 = vmatpush1.bf16.msra.mxu0 0
        %648 = vmatprep.subr.bf16.mxu0 0
        %649 = vmatpush1.bf16.msra.mxu0 0
        %650 = vmatprep.subr.bf16.mxu0 0
        %651 = vmatpush1.bf16.msra.mxu0 0
        %652 = vmatprep.subr.bf16.mxu0 0
        %653 = vmatpush1.bf16.msra.mxu0 0
        %654 = vmatprep.subr.bf16.mxu0 0
        %655 = vmatpush1.bf16.msra.mxu0 0
        %656 = vmatprep.subr.bf16.mxu0 0
        %657 = vmatpush1.bf16.msra.mxu0 0
        %658 = vmatprep.subr.bf16.mxu0 0
        %659 = vmatpush1.bf16.msra.mxu0 0
        %660 = vmatprep.subr.bf16.mxu0 0
        %661 = vmatpush1.bf16.msra.mxu0 0
        %662 = vmatprep.mubr.bf16.mxu0 0
        %663 = vmatmul.mubr.bf16.gmra.mrb[0].mxu0 %v607
        %v664 = vpop.f32.mrb[0].mxu0
        %v665 = vadd.f32 %v468, %v664
        %v666 = vpop.f32.mrb[0].mxu0
        %v667 = vpop.f32.mrb[0].mxu0
        %v668 = vadd.f32 %v471, %v667
        %v669 = vpop.f32.mrb[0].mxu0
        %670 = vmatprep.mubr.bf16.mxu0 0
        %671 = vmatmul.mubr.bf16.gmra.mrb[0].mxu0 %v610
        %v672 = vpop.f32.mrb[0].mxu0
        %v673 = vadd.f32 %v476, %v672
        %v674 = vpop.f32.mrb[0].mxu0
        %v675 = vpop.f32.mrb[0].mxu0
        %v676 = vadd.f32 %v479, %v675
        %v677 = vpop.f32.mrb[0].mxu0
        %678 = vmatprep.mubr.bf16.mxu0 0
        %679 = vmatmul.mubr.bf16.gmra.mrb[0].mxu0 %v613
        %v680 = vpop.f32.mrb[0].mxu0
        %v681 = vadd.f32 %v484, %v680
        %v682 = vpop.f32.mrb[0].mxu0
        %v683 = vpop.f32.mrb[0].mxu0
        %v684 = vadd.f32 %v487, %v683
        %v685 = vpop.f32.mrb[0].mxu0
        %686 = vmatprep.mubr.bf16.mxu0 0
        %687 = vmatmul.mubr.bf16.gmra.mrb[0].mxu0 %v616
        %v688 = vpop.f32.mrb[0].mxu0
        %v689 = vadd.f32 %v492, %v688
        %v690 = vpop.f32.mrb[0].mxu0
        %v691 = vpop.f32.mrb[0].mxu0
        %v692 = vadd.f32 %v495, %v691
        %v693 = vpop.f32.mrb[0].mxu0
        %694 = vmatprep.mubr.bf16.mxu0 0
        %695 = vmatmul.mubr.bf16.gmra.mrb[0].mxu0 %v619
        %v696 = vpop.f32.mrb[0].mxu0
        %v697 = vadd.f32 %v500, %v696
        %v698 = vpop.f32.mrb[0].mxu0
        %v699 = vpop.f32.mrb[0].mxu0
        %v700 = vadd.f32 %v503, %v699
        %v701 = vpop.f32.mrb[0].mxu0
        %702 = vmatprep.mubr.bf16.mxu0 0
        %703 = vmatmul.mubr.bf16.gmra.mrb[0].mxu0 %v622
        %v704 = vpop.f32.mrb[0].mxu0
        %v705 = vadd.f32 %v508, %v704
        %v706 = vpop.f32.mrb[0].mxu0
        %v707 = vpop.f32.mrb[0].mxu0
        %v708 = vadd.f32 %v511, %v707
        %v709 = vpop.f32.mrb[0].mxu0
        %710 = vmatprep.mubr.bf16.mxu0 0
        %711 = vmatmul.mubr.bf16.gmra.mrb[0].mxu0 %v625
        %v712 = vpop.f32.mrb[0].mxu0
        %v713 = vadd.f32 %v516, %v712
        %v714 = vpop.f32.mrb[0].mxu0
        %v715 = vpop.f32.mrb[0].mxu0
        %v716 = vadd.f32 %v519, %v715
        %v717 = vpop.f32.mrb[0].mxu0
        %718 = vmatprep.mubr.bf16.mxu0 0
        %719 = vmatmul.mubr.bf16.gmra.mrb[0].mxu0 %v628
        %v720 = vpop.f32.mrb[0].mxu0
        %v721 = vadd.f32 %v524, %v720
        %v722 = vpop.f32.mrb[0].mxu0
        %v723 = vpop.f32.mrb[0].mxu0
        %v724 = vadd.f32 %v527, %v723
        %v725 = vpop.f32.mrb[0].mxu0
        %726 = vdwg.mxu0
        %s727 = scalar_lea.vmem %s237, 16 [#allocation2]
        %v728 = vld [vmem:[%s727] sm:$0xf]
        %v729 = vld [vmem:[%s727 + $0x4] sm:$0xf]
        %v730 = vld [vmem:[%s727 + $0x8] sm:$0xf]
        %v731 = vld [vmem:[%s727 + $0xc] sm:$0xf]
        %v732 = vld [vmem:[%s727 + $0x10] sm:$0xf]
        %v733 = vld [vmem:[%s727 + $0x14] sm:$0xf]
        %v734 = vld [vmem:[%s727 + $0x18] sm:$0xf]
        %v735 = vld [vmem:[%s727 + $0x1c] sm:$0xf]
        %v736 = vld [vmem:[%s727 + $0x20] sm:$0xf]
        %v737 = vld [vmem:[%s727 + $0x24] sm:$0xf]
        %v738 = vld [vmem:[%s727 + $0x28] sm:$0xf]
        %v739 = vld [vmem:[%s727 + $0x2c] sm:$0xf]
        %v740 = vld [vmem:[%s727 + $0x30] sm:$0xf]
        %v741 = vld [vmem:[%s727 + $0x34] sm:$0xf]
        %v742 = vld [vmem:[%s727 + $0x38] sm:$0xf]
        %v743 = vld [vmem:[%s727 + $0x3c] sm:$0xf]
        %s744 = scalar_lea.vmem [#allocation5], 96
        %v745 = vld [vmem:[%s744] sm:$0xf]
        %v746 = vld [vmem:[%s744 + $0x4] sm:$0xf]
        %v747 = vld [vmem:[%s744 + $0x8] sm:$0xf]
        %v748 = vld [vmem:[%s744 + $0xc] sm:$0xf]
        %v749 = vld [vmem:[%s744 + $0x10] sm:$0xf]
        %v750 = vld [vmem:[%s744 + $0x14] sm:$0xf]
        %v751 = vld [vmem:[%s744 + $0x18] sm:$0xf]
        %v752 = vld [vmem:[%s744 + $0x1c] sm:$0xf]
        %v753 = vld [vmem:[%s744 + $0x20] sm:$0xf]
        %v754 = vld [vmem:[%s744 + $0x24] sm:$0xf]
        %v755 = vld [vmem:[%s744 + $0x28] sm:$0xf]
        %v756 = vld [vmem:[%s744 + $0x2c] sm:$0xf]
        %v773 = vunpack.c.l.b16 %v728
        %v774 = vunpack.c.l.b16 %v729
        %v775 = vunpack.c.l.b16 %v730
        %v776 = vunpack.c.l.b16 %v731
        %v777 = vunpack.c.l.b16 %v732
        %v778 = vunpack.c.l.b16 %v733
        %v779 = vunpack.c.l.b16 %v734
        %v780 = vunpack.c.l.b16 %v735
        %v781 = vunpack.c.l.b16 %v736
        %v782 = vunpack.c.l.b16 %v737
        %v783 = vunpack.c.l.b16 %v738
        %v784 = vunpack.c.l.b16 %v739
        %v785 = vunpack.c.l.b16 %v740
        %v786 = vunpack.c.l.b16 %v741
        %v787 = vunpack.c.l.b16 %v742
        %v788 = vunpack.c.l.b16 %v743
        %v789 = vpack.c.b16 %v774, %v773
        %v790 = vpack.c.b16 %v776, %v775
        %v791 = vpack.c.b16 %v778, %v777
        %v792 = vpack.c.b16 %v780, %v779
        %v793 = vpack.c.b16 %v782, %v781
        %v794 = vpack.c.b16 %v784, %v783
        %v795 = vpack.c.b16 %v786, %v785
        %v796 = vpack.c.b16 %v788, %v787
        %v809 = vunpack.c.l.b16 %v745
        %v810 = vunpack.c.l.b16 %v746
        %v811 = vunpack.c.l.b16 %v747
        %v812 = vunpack.c.l.b16 %v748
        %v813 = vunpack.c.l.b16 %v749
        %v814 = vunpack.c.l.b16 %v750
        %v815 = vunpack.c.l.b16 %v751
        %v816 = vunpack.c.l.b16 %v752
        %v817 = vunpack.c.l.b16 %v753
        %v818 = vunpack.c.l.b16 %v754
        %v819 = vunpack.c.l.b16 %v755
        %v820 = vunpack.c.l.b16 %v756
        %v821 = vpack.c.b16 %v810, %v809
        %v822 = vpack.c.b16 %v812, %v811
        %v823 = vpack.c.b16 %v814, %v813
        %v824 = vpack.c.b16 %v816, %v815
        %v825 = vpack.c.b16 %v818, %v817
        %v826 = vpack.c.b16 %v820, %v819
        %v834 = vsel %vm408, %v789, 0
        %v837 = vsel %vm408, %v790, 0
        %v840 = vsel %vm408, %v791, 0
        %v843 = vsel %vm408, %v792, 0
        %v846 = vsel %vm408, %v793, 0
        %v849 = vsel %vm408, %v794, 0
        %v852 = vsel %vm408, %v795, 0
        %v855 = vsel %vm408, %v796, 0
        %857 = vmatprep.subr.bf16.mxu0 0
        %858 = vmatpush1.bf16.msra.mxu0 %v821
        %859 = vmatprep.subr.bf16.mxu0 0
        %860 = vmatpush1.bf16.msra.mxu0 %v822
        %861 = vmatprep.subr.bf16.mxu0 0
        %862 = vmatpush1.bf16.msra.mxu0 %v823
        %863 = vmatprep.subr.bf16.mxu0 0
        %864 = vmatpush1.bf16.msra.mxu0 %v824
        %865 = vmatprep.subr.bf16.mxu0 0
        %866 = vmatpush1.bf16.msra.mxu0 %v825
        %867 = vmatprep.subr.bf16.mxu0 0
        %868 = vmatpush1.bf16.msra.mxu0 %v826
        %869 = vmatprep.subr.bf16.mxu0 0
        %870 = vmatpush1.bf16.msra.mxu0 0
        %871 = vmatprep.subr.bf16.mxu0 0
        %872 = vmatpush1.bf16.msra.mxu0 0
        %873 = vmatprep.subr.bf16.mxu0 0
        %874 = vmatpush1.bf16.msra.mxu0 0
        %875 = vmatprep.subr.bf16.mxu0 0
        %876 = vmatpush1.bf16.msra.mxu0 0
        %877 = vmatprep.subr.bf16.mxu0 0
        %878 = vmatpush1.bf16.msra.mxu0 0
        %879 = vmatprep.subr.bf16.mxu0 0
        %880 = vmatpush1.bf16.msra.mxu0 0
        %881 = vmatprep.subr.bf16.mxu0 0
        %882 = vmatpush1.bf16.msra.mxu0 0
        %883 = vmatprep.subr.bf16.mxu0 0
        %884 = vmatpush1.bf16.msra.mxu0 0
        %885 = vmatprep.subr.bf16.mxu0 0
        %886 = vmatpush1.bf16.msra.mxu0 0
        %887 = vmatprep.subr.bf16.mxu0 0
        %888 = vmatpush1.bf16.msra.mxu0 0
        %889 = vmatprep.mubr.bf16.mxu0 0
        %890 = vmatmul.mubr.bf16.gmra.mrb[0].mxu0 %v834
        %v891 = vpop.f32.mrb[0].mxu0
        %v892 = vadd.f32 0.0, %v891
        %v893 = vpop.f32.mrb[0].mxu0
        %v894 = vpop.f32.mrb[0].mxu0
        %v895 = vadd.f32 0.0, %v894
        %v896 = vpop.f32.mrb[0].mxu0
        %897 = vmatprep.mubr.bf16.mxu0 0
        %898 = vmatmul.mubr.bf16.gmra.mrb[0].mxu0 %v837
        %v899 = vpop.f32.mrb[0].mxu0
        %v900 = vadd.f32 0.0, %v899
        %v901 = vpop.f32.mrb[0].mxu0
        %v902 = vpop.f32.mrb[0].mxu0
        %v903 = vadd.f32 0.0, %v902
        %v904 = vpop.f32.mrb[0].mxu0
        %905 = vmatprep.mubr.bf16.mxu0 0
        %906 = vmatmul.mubr.bf16.gmra.mrb[0].mxu0 %v840
        %v907 = vpop.f32.mrb[0].mxu0
        %v908 = vadd.f32 0.0, %v907
        %v909 = vpop.f32.mrb[0].mxu0
        %v910 = vpop.f32.mrb[0].mxu0
        %v911 = vadd.f32 0.0, %v910
        %v912 = vpop.f32.mrb[0].mxu0
        %913 = vmatprep.mubr.bf16.mxu0 0
        %914 = vmatmul.mubr.bf16.gmra.mrb[0].mxu0 %v843
        %v915 = vpop.f32.mrb[0].mxu0
        %v916 = vadd.f32 0.0, %v915
        %v917 = vpop.f32.mrb[0].mxu0
        %v918 = vpop.f32.mrb[0].mxu0
        %v919 = vadd.f32 0.0, %v918
        %v920 = vpop.f32.mrb[0].mxu0
        %921 = vmatprep.mubr.bf16.mxu0 0
        %922 = vmatmul.mubr.bf16.gmra.mrb[0].mxu0 %v846
        %v923 = vpop.f32.mrb[0].mxu0
        %v924 = vadd.f32 0.0, %v923
        %v925 = vpop.f32.mrb[0].mxu0
        %v926 = vpop.f32.mrb[0].mxu0
        %v927 = vadd.f32 0.0, %v926
        %v928 = vpop.f32.mrb[0].mxu0
        %929 = vmatprep.mubr.bf16.mxu0 0
        %930 = vmatmul.mubr.bf16.gmra.mrb[0].mxu0 %v849
        %v931 = vpop.f32.mrb[0].mxu0
        %v932 = vadd.f32 0.0, %v931
        %v933 = vpop.f32.mrb[0].mxu0
        %v934 = vpop.f32.mrb[0].mxu0
        %v935 = vadd.f32 0.0, %v934
        %v936 = vpop.f32.mrb[0].mxu0
        %937 = vmatprep.mubr.bf16.mxu0 0
        %938 = vmatmul.mubr.bf16.gmra.mrb[0].mxu0 %v852
        %v939 = vpop.f32.mrb[0].mxu0
        %v940 = vadd.f32 0.0, %v939
        %v941 = vpop.f32.mrb[0].mxu0
        %v942 = vpop.f32.mrb[0].mxu0
        %v943 = vadd.f32 0.0, %v942
        %v944 = vpop.f32.mrb[0].mxu0
        %945 = vmatprep.mubr.bf16.mxu0 0
        %946 = vmatmul.mubr.bf16.gmra.mrb[0].mxu0 %v855
        %v947 = vpop.f32.mrb[0].mxu0
        %v948 = vadd.f32 0.0, %v947
        %v949 = vpop.f32.mrb[0].mxu0
        %v950 = vpop.f32.mrb[0].mxu0
        %v951 = vadd.f32 0.0, %v950
        %v952 = vpop.f32.mrb[0].mxu0
        %953 = vdwg.mxu0
        %v954 = vadd.f32 %v665, %v892
        %v955 = vadd.f32 %v668, %v895
        %v956 = vadd.f32 %v673, %v900
        %v957 = vadd.f32 %v676, %v903
        %v958 = vadd.f32 %v681, %v908
        %v959 = vadd.f32 %v684, %v911
        %v960 = vadd.f32 %v689, %v916
        %v961 = vadd.f32 %v692, %v919
        %v962 = vadd.f32 %v697, %v924
        %v963 = vadd.f32 %v700, %v927
        %v964 = vadd.f32 %v705, %v932
        %v965 = vadd.f32 %v708, %v935
        %v966 = vadd.f32 %v713, %v940
        %v967 = vadd.f32 %v716, %v943
        %v968 = vadd.f32 %v721, %v948
        %v969 = vadd.f32 %v724, %v951
        %v970 = vld [vmem:[%s2] sm:$0x1]
        %v972 = vlaneseq
        %v973 = vshrl.u32 %v972, 7
        %v974 = vsub.s32 0, %v973
        %v975 = vrot.slane %v970, %v974
        %v977 = vadd.f32 %v954, %v975
        %v978 = vadd.f32 %v955, %v975
        %v979 = vadd.f32 %v956, %v975
        %v980 = vadd.f32 %v957, %v975
        %v981 = vadd.f32 %v958, %v975
        %v982 = vadd.f32 %v959, %v975
        %v983 = vadd.f32 %v960, %v975
        %v984 = vadd.f32 %v961, %v975
        %v985 = vadd.f32 %v962, %v975
        %v986 = vadd.f32 %v963, %v975
        %v987 = vadd.f32 %v964, %v975
        %v988 = vadd.f32 %v965, %v975
        %v989 = vadd.f32 %v966, %v975
        %v990 = vadd.f32 %v967, %v975
        %v991 = vadd.f32 %v968, %v975
        %v992 = vadd.f32 %v969, %v975
        %v993 = vmax.f32 %v977, 0.0
        %v994 = vmax.f32 %v978, 0.0
        %v995 = vmax.f32 %v979, 0.0
        %v996 = vmax.f32 %v980, 0.0
        %v997 = vmax.f32 %v981, 0.0
        %v998 = vmax.f32 %v982, 0.0
        %v999 = vmax.f32 %v983, 0.0
        %v1000 = vmax.f32 %v984, 0.0
        %v1001 = vmax.f32 %v985, 0.0
        %v1002 = vmax.f32 %v986, 0.0
        %v1003 = vmax.f32 %v987, 0.0
        %v1004 = vmax.f32 %v988, 0.0
        %v1005 = vmax.f32 %v989, 0.0
        %v1006 = vmax.f32 %v990, 0.0
        %v1007 = vmax.f32 %v991, 0.0
        %v1008 = vmax.f32 %v992, 0.0
        %v1009 = vpack.c.bf16 %v994, %v993
        %v1010 = vpack.c.bf16 %v996, %v995
        %v1011 = vpack.c.bf16 %v998, %v997
        %v1012 = vpack.c.bf16 %v1000, %v999
        %v1013 = vpack.c.bf16 %v1002, %v1001
        %v1014 = vpack.c.bf16 %v1004, %v1003
        %v1015 = vpack.c.bf16 %v1006, %v1005
        %v1016 = vpack.c.bf16 %v1008, %v1007
        %v1017 = vld [vmem:[#allocation7] sm:$0xf]
        %v1018 = vld [vmem:[#allocation7 + $0x4] sm:$0xf]
        %v1019 = vld [vmem:[#allocation7 + $0x8] sm:$0xf]
        %v1020 = vld [vmem:[#allocation7 + $0xc] sm:$0xf]
        %v1021 = vld [vmem:[#allocation7 + $0x10] sm:$0xf]
        %v1022 = vld [vmem:[#allocation7 + $0x14] sm:$0xf]
        %v1023 = vld [vmem:[#allocation7 + $0x18] sm:$0xf]
        %v1024 = vld [vmem:[#allocation7 + $0x1c] sm:$0xf]
        %v1025 = vld [vmem:[#allocation7 + $0x20] sm:$0xf]
        %v1026 = vld [vmem:[#allocation7 + $0x24] sm:$0xf]
        %v1027 = vld [vmem:[#allocation7 + $0x28] sm:$0xf]
        %v1028 = vld [vmem:[#allocation7 + $0x2c] sm:$0xf]
        %v1029 = vld [vmem:[#allocation7 + $0x30] sm:$0xf]
        %v1030 = vld [vmem:[#allocation7 + $0x34] sm:$0xf]
        %v1031 = vld [vmem:[#allocation7 + $0x38] sm:$0xf]
        %v1032 = vld [vmem:[#allocation7 + $0x3c] sm:$0xf]
        %v1033 = vld [vmem:[%s4] sm:$0x1]
        %v1035 = vlaneseq
        %v1036 = vshrl.u32 %v1035, 7
        %v1037 = vsub.s32 0, %v1036
        %v1038 = vrot.slane %v1033, %v1037
        %v1056 = vunpack.c.l.b16 %v1017
        %v1057 = vunpack.c.l.b16 %v1018
        %v1058 = vunpack.c.l.b16 %v1019
        %v1059 = vunpack.c.l.b16 %v1020
        %v1060 = vunpack.c.l.b16 %v1021
        %v1061 = vunpack.c.l.b16 %v1022
        %v1062 = vunpack.c.l.b16 %v1023
        %v1063 = vunpack.c.l.b16 %v1024
        %v1064 = vunpack.c.l.b16 %v1025
        %v1065 = vunpack.c.l.b16 %v1026
        %v1066 = vunpack.c.l.b16 %v1027
        %v1067 = vunpack.c.l.b16 %v1028
        %v1068 = vunpack.c.l.b16 %v1029
        %v1069 = vunpack.c.l.b16 %v1030
        %v1070 = vunpack.c.l.b16 %v1031
        %v1071 = vunpack.c.l.b16 %v1032
        %v1072 = vpack.c.b16 %v1057, %v1056
        %v1073 = vpack.c.b16 %v1059, %v1058
        %v1074 = vpack.c.b16 %v1061, %v1060
        %v1075 = vpack.c.b16 %v1063, %v1062
        %v1076 = vpack.c.b16 %v1065, %v1064
        %v1077 = vpack.c.b16 %v1067, %v1066
        %v1078 = vpack.c.b16 %v1069, %v1068
        %v1079 = vpack.c.b16 %v1071, %v1070
        %1088 = vmatprep.subr.bf16.mxu0 0
        %1089 = vmatpush1.bf16.msra.mxu0 %v1072
        %1090 = vmatprep.subr.bf16.mxu0 0
        %1091 = vmatpush1.bf16.msra.mxu0 %v1073
        %1092 = vmatprep.subr.bf16.mxu0 0
        %1093 = vmatpush1.bf16.msra.mxu0 %v1074
        %1094 = vmatprep.subr.bf16.mxu0 0
        %1095 = vmatpush1.bf16.msra.mxu0 %v1075
        %1096 = vmatprep.subr.bf16.mxu0 0
        %1097 = vmatpush1.bf16.msra.mxu0 %v1076
        %1098 = vmatprep.subr.bf16.mxu0 0
        %1099 = vmatpush1.bf16.msra.mxu0 %v1077
        %1100 = vmatprep.subr.bf16.mxu0 0
        %1101 = vmatpush1.bf16.msra.mxu0 %v1078
        %1102 = vmatprep.subr.bf16.mxu0 0
        %1103 = vmatpush1.bf16.msra.mxu0 %v1079
        %1104 = vmatprep.subr.bf16.mxu0 0
        %1105 = vmatpush1.bf16.msra.mxu0 0
        %1106 = vmatprep.subr.bf16.mxu0 0
        %1107 = vmatpush1.bf16.msra.mxu0 0
        %1108 = vmatprep.subr.bf16.mxu0 0
        %1109 = vmatpush1.bf16.msra.mxu0 0
        %1110 = vmatprep.subr.bf16.mxu0 0
        %1111 = vmatpush1.bf16.msra.mxu0 0
        %1112 = vmatprep.subr.bf16.mxu0 0
        %1113 = vmatpush1.bf16.msra.mxu0 0
        %1114 = vmatprep.subr.bf16.mxu0 0
        %1115 = vmatpush1.bf16.msra.mxu0 0
        %1116 = vmatprep.subr.bf16.mxu0 0
        %1117 = vmatpush1.bf16.msra.mxu0 0
        %1118 = vmatprep.subr.bf16.mxu0 0
        %1119 = vmatpush1.bf16.msra.mxu0 0
        %1120 = vmatprep.mubr.bf16.mxu0 0
        %1121 = vmatmul.mubr.bf16.gmra.mrb[0].mxu0 %v1009
        %v1122 = vpop.f32.mrb[0].mxu0
        %v1123 = vadd.f32 %v1038, %v1122
        %v1124 = vpop.f32.mrb[0].mxu0
        %v1125 = vpop.f32.mrb[0].mxu0
        %v1126 = vadd.f32 %v1038, %v1125
        %v1127 = vpop.f32.mrb[0].mxu0
        %1128 = vmatprep.mubr.bf16.mxu0 0
        %1129 = vmatmul.mubr.bf16.gmra.mrb[0].mxu0 %v1010
        %v1130 = vpop.f32.mrb[0].mxu0
        %v1131 = vadd.f32 %v1038, %v1130
        %v1132 = vpop.f32.mrb[0].mxu0
        %v1133 = vpop.f32.mrb[0].mxu0
        %v1134 = vadd.f32 %v1038, %v1133
        %v1135 = vpop.f32.mrb[0].mxu0
        %1136 = vmatprep.mubr.bf16.mxu0 0
        %1137 = vmatmul.mubr.bf16.gmra.mrb[0].mxu0 %v1011
        %v1138 = vpop.f32.mrb[0].mxu0
        %v1139 = vadd.f32 %v1038, %v1138
        %v1140 = vpop.f32.mrb[0].mxu0
        %v1141 = vpop.f32.mrb[0].mxu0
        %v1142 = vadd.f32 %v1038, %v1141
        %v1143 = vpop.f32.mrb[0].mxu0
        %1144 = vmatprep.mubr.bf16.mxu0 0
        %1145 = vmatmul.mubr.bf16.gmra.mrb[0].mxu0 %v1012
        %v1146 = vpop.f32.mrb[0].mxu0
        %v1147 = vadd.f32 %v1038, %v1146
        %v1148 = vpop.f32.mrb[0].mxu0
        %v1149 = vpop.f32.mrb[0].mxu0
        %v1150 = vadd.f32 %v1038, %v1149
        %v1151 = vpop.f32.mrb[0].mxu0
        %1152 = vmatprep.mubr.bf16.mxu0 0
        %1153 = vmatmul.mubr.bf16.gmra.mrb[0].mxu0 %v1013
        %v1154 = vpop.f32.mrb[0].mxu0
        %v1155 = vadd.f32 %v1038, %v1154
        %v1156 = vpop.f32.mrb[0].mxu0
        %v1157 = vpop.f32.mrb[0].mxu0
        %v1158 = vadd.f32 %v1038, %v1157
        %v1159 = vpop.f32.mrb[0].mxu0
        %1160 = vmatprep.mubr.bf16.mxu0 0
        %1161 = vmatmul.mubr.bf16.gmra.mrb[0].mxu0 %v1014
        %v1162 = vpop.f32.mrb[0].mxu0
        %v1163 = vadd.f32 %v1038, %v1162
        %v1164 = vpop.f32.mrb[0].mxu0
        %v1165 = vpop.f32.mrb[0].mxu0
        %v1166 = vadd.f32 %v1038, %v1165
        %v1167 = vpop.f32.mrb[0].mxu0
        %1168 = vmatprep.mubr.bf16.mxu0 0
        %1169 = vmatmul.mubr.bf16.gmra.mrb[0].mxu0 %v1015
        %v1170 = vpop.f32.mrb[0].mxu0
        %v1171 = vadd.f32 %v1038, %v1170
        %v1172 = vpop.f32.mrb[0].mxu0
        %v1173 = vpop.f32.mrb[0].mxu0
        %v1174 = vadd.f32 %v1038, %v1173
        %v1175 = vpop.f32.mrb[0].mxu0
        %1176 = vmatprep.mubr.bf16.mxu0 0
        %1177 = vmatmul.mubr.bf16.gmra.mrb[0].mxu0 %v1016
        %v1178 = vpop.f32.mrb[0].mxu0
        %v1179 = vadd.f32 %v1038, %v1178
        %v1180 = vpop.f32.mrb[0].mxu0
        %v1181 = vpop.f32.mrb[0].mxu0
        %v1182 = vadd.f32 %v1038, %v1181
        %v1183 = vpop.f32.mrb[0].mxu0
        %1184 = vdwg.mxu0
        %1185 = vst [vmem:[%s271] sm:$0xff] %v1123
        %1186 = vst [vmem:[%s271 + $0x8] sm:$0xff] %v1126
        %1187 = vst [vmem:[%s271 + $0x10] sm:$0xff] %v1131
        %1188 = vst [vmem:[%s271 + $0x18] sm:$0xff] %v1134
        %1189 = vst [vmem:[%s271 + $0x20] sm:$0xff] %v1139
        %1190 = vst [vmem:[%s271 + $0x28] sm:$0xff] %v1142
        %1191 = vst [vmem:[%s271 + $0x30] sm:$0xff] %v1147
        %1192 = vst [vmem:[%s271 + $0x38] sm:$0xff] %v1150
        %1193 = vst [vmem:[%s271 + $0x40] sm:$0xff] %v1155
        %1194 = vst [vmem:[%s271 + $0x48] sm:$0xff] %v1158
        %1195 = vst [vmem:[%s271 + $0x50] sm:$0xff] %v1163
        %1196 = vst [vmem:[%s271 + $0x58] sm:$0xff] %v1166
        %1197 = vst [vmem:[%s271 + $0x60] sm:$0xff] %v1171
        %1198 = vst [vmem:[%s271 + $0x68] sm:$0xff] %v1174
        %1199 = vst [vmem:[%s271 + $0x70] sm:$0xff] %v1179
        %1200 = vst [vmem:[%s271 + $0x78] sm:$0xff] %v1182
        %s1201 = sand.u32 %s141, 1
        %s1202 = scalar_lea.sflag [#allocation4], %s1201
        %s1203 = sand.u32 %s141, 1
        %s1204 = smul.addr %s1203, 128
        %s1205 = scalar_lea.vmem [#allocation8], %s1204
        // Predicated region
        $region53: #{tpu_custom_call.1} parent=39 // pred_check
          %p1206 = pneg %p151
        $region54: #{tpu_custom_call.1} parent=39 // pred_check_branch
          %1208 = sbr.rel (%p1206) target = $region56
        $region55: #{tpu_custom_call.1} parent=39 // pred_region
          %s1209 = smul.u32 16, %s23
          %s1211 = ssub.s32 2048, 2048
          %1212 = vsyncadd %s1202, %s1211
          %s1213 = smul.addr %s1209, 128
          %s1214 = scalar_lea.hbm %s5, %s1213
          %s1215 = sshll.u32 %s1205, 4
          %s1216 = int_to_ptr.vmem [resolvable:$true] %s1215
          %1221 = dma.vmem_to_hbm [thread:$0]  %s1216, 2048, %s1214, %s1202, 128, 128, 8
        $region56: #{tpu_custom_call.1} parent=39 // pred_fallthru
          _
      $region40: #{tpu_custom_call.1} parent=5 // pred_fallthru
        _
      %p1222 = scmp.le.s32.totalorder 2, %s18
      // Predicated region
      $region57: #{tpu_custom_call.1} parent=5 // pred_check
        %p1223 = pneg %p1222
      $region58: #{tpu_custom_call.1} parent=5 // pred_check_branch
        %1225 = sbr.rel (%p1223) target = $region60
      $region59: #{tpu_custom_call.1} parent=5 // pred_region
        %s1226 = ssub.s32 %s18, 2
        // Predicated region
        $region61: #{tpu_custom_call.1} parent=59 // pred_check
          %p1227 = pneg %p157
        $region62: #{tpu_custom_call.1} parent=59 // pred_check_branch
          %1229 = sbr.rel (%p1227) target = $region64
        $region63: #{tpu_custom_call.1} parent=59 // pred_region
          %s1230 = sand.u32 %s142, 1
          %s1231 = scalar_lea.sflag [#allocation4], %s1230
          %s1232 = sand.u32 %s142, 1
          %s1233 = smul.addr %s1232, 128
          %s1234 = scalar_lea.vmem [#allocation8], %s1233
          %1235 = dma.done %s1231, 2048
        $region64: #{tpu_custom_call.1} parent=59 // pred_fallthru
          _
      $region60: #{tpu_custom_call.1} parent=5 // pred_fallthru
        _
    $region6: #{tpu_custom_call.1} parent=1 // loop_footer
      %s22 = sadd.s32 1, %s18
    $region7: #{tpu_custom_call.1} parent=1 // loop_footer_branch
      %17 = sbr.rel target = $region3
    $region8: #{tpu_custom_call.1} parent=1 // loop_exit
      _
    %1236 = vsyncpa [#allocation3], 1
    %s1237 = scalar_lea.sflag [#allocation3], 1
    %1238 = vsyncpa %s1237, 1
    %1239 = vsyncpa [#allocation6], 1
    %1240 = vsyncpa [#allocation4], 1
    %s1241 = scalar_lea.sflag [#allocation4], 1
    %1242 = vsyncpa %s1241, 1

</llo_original>
